<compile_context>
chip_gen: v7x
topology: tpu7x:2x2x1
jax: 0.10.0
libtpu: 0.0.40
codegen_flags: <defaults>
</compile_context>

<pallas_src>
import jax
import jax.numpy as jnp
from jax.experimental import pallas as pl
from jax.experimental.pallas import tpu as pltpu


def mlp_kernel(x_ref, w1_ref, b1_ref, w2_ref, b2_ref, w3_ref, b3_ref, o_ref):
    # Layer 1: Linear (bf16 operands, f32 accumulate) + f32 bias + ReLU
    h = jnp.dot(x_ref[...], w1_ref[...], preferred_element_type=jnp.float32)
    h = jnp.maximum(h + b1_ref[...], 0.0)
    # Layer 2
    h = jnp.dot(h.astype(w2_ref.dtype), w2_ref[...],
                preferred_element_type=jnp.float32)
    h = jnp.maximum(h + b2_ref[...], 0.0)
    # Layer 3 (no activation)
    o = jnp.dot(h.astype(w3_ref.dtype), w3_ref[...],
                preferred_element_type=jnp.float32)
    o_ref[...] = (o + b3_ref[...]).astype(o_ref.dtype)


def _round_up(x, m):
    return ((x + m - 1) // m) * m


def _pad_to(a, shape):
    return jnp.pad(a, [(0, t - s) for s, t in zip(a.shape, shape)])


def mlp_encoder_forward(x, params, *, batch_tile=512,
                        compute_dtype=jnp.bfloat16,
                        single_buffer_weights=False):
    """Pallas forward pass of MLPEncoder (hidden_layer=2, dropout=0).

    x: [B, input_dim] float32
    params: dict with w1 [Din,H], b1 [1,H], w2 [H,H], b2 [1,H],
            w3 [H,Dout], b3 [1,Dout]  (weights are transposed vs nn.Linear)

    batch_tile: primary perf knob.  Keep it a multiple of 512 for large B
    (aligned to both v5e and v6e/v7x MXU heights); for small B the wrapper
    shrinks it so only minimal zero-padding is added.
    """
    B, Din = x.shape
    H = params["w1"].shape[1]
    Dout = params["w3"].shape[1]
    out_dtype = x.dtype

    LANE = 128
    Din_p = _round_up(Din, LANE)
    H_p = _round_up(H, LANE)
    Dout_p = _round_up(Dout, LANE)

    # Batch tiling: large MXU-aligned tiles, ragged batches handled by padding.
    bt = min(batch_tile, _round_up(B, 8))
    B_p = _round_up(B, bt)
    grid = (B_p // bt,)

    # Zero-pad to lane-aligned shapes; cast MXU operands to bf16, biases in f32.
    x_p = _pad_to(x, (B_p, Din_p)).astype(compute_dtype)
    w1 = _pad_to(params["w1"], (Din_p, H_p)).astype(compute_dtype)
    w2 = _pad_to(params["w2"], (H_p, H_p)).astype(compute_dtype)
    w3 = _pad_to(params["w3"], (H_p, Dout_p)).astype(compute_dtype)
    b1 = _pad_to(params["b1"], (1, H_p)).astype(jnp.float32)
    b2 = _pad_to(params["b2"], (1, H_p)).astype(jnp.float32)
    b3 = _pad_to(params["b3"], (1, Dout_p)).astype(jnp.float32)

    def const_spec(shape):
        # Constant-index blocks (weights/biases): resident across all tiles.
        if single_buffer_weights:
            return pl.BlockSpec(shape, lambda i: (0,) * len(shape),
                                pipeline_mode=pl.Buffered(1))
        return pl.BlockSpec(shape, lambda i: (0,) * len(shape))

    cbytes = jnp.dtype(compute_dtype).itemsize
    obytes = jnp.dtype(out_dtype).itemsize
    w_elems = int(w1.size + w2.size + w3.size)
    b_elems = int(b1.size + b2.size + b3.size)

    # VMEM footprint estimate (double-buffered x/out tiles + weights + live f32
    # activations); cap at 64 MiB so the limit is valid on v7x too.
    w_bufs = 1 if single_buffer_weights else 2
    vmem_est = (2 * bt * Din_p * cbytes
                + 2 * bt * Dout_p * obytes
                + w_bufs * w_elems * cbytes
                + 2 * b_elems * 4
                + 3 * bt * H_p * 4)
    vmem_limit = int(min(max(2 * vmem_est, 32 * 1024 * 1024), 64 * 1024 * 1024))

    cost = pl.CostEstimate(
        flops=2 * B_p * (Din_p * H_p + H_p * H_p + H_p * Dout_p),
        transcendentals=0,
        bytes_accessed=int(x_p.size * cbytes + w_elems * cbytes
                           + b_elems * 4 + B_p * Dout_p * obytes),
    )

    out_p = pl.pallas_call(
        mlp_kernel,
        out_shape=jax.ShapeDtypeStruct((B_p, Dout_p), out_dtype),
        grid_spec=pltpu.PrefetchScalarGridSpec(
            num_scalar_prefetch=0,
            grid=grid,
            in_specs=[
                pl.BlockSpec((bt, Din_p), lambda i: (i, 0)),   # x tile
                const_spec((Din_p, H_p)),                      # w1
                const_spec((1, H_p)),                          # b1
                const_spec((H_p, H_p)),                        # w2
                const_spec((1, H_p)),                          # b2
                const_spec((H_p, Dout_p)),                     # w3
                const_spec((1, Dout_p)),                       # b3
            ],
            out_specs=pl.BlockSpec((bt, Dout_p), lambda i: (i, 0)),
        ),
        compiler_params=pltpu.CompilerParams(
            dimension_semantics=("parallel",),   # shards batch tiles over v7x TCs
            vmem_limit_bytes=vmem_limit,
        ),
        cost_estimate=cost,
    )(x_p, w1, b1, w2, b2, w3, b3)

    # Strip batch + lane padding.
    return out_p[:B, :Dout]


def init_params(key, input_dim, hidden_dim, output_dim):
    """Deterministic init matching nn.Linear layer shapes (stored transposed)."""
    ks = jax.random.split(key, 6)

    def lin(kw, kb, din, dout):
        bound = 1.0 / jnp.sqrt(din)
        w = jax.random.uniform(kw, (din, dout), jnp.float32, -bound, bound)
        b = jax.random.uniform(kb, (1, dout), jnp.float32, -bound, bound)
        return w, b

    w1, b1 = lin(ks[0], ks[1], input_dim, hidden_dim)
    w2, b2 = lin(ks[2], ks[3], hidden_dim, hidden_dim)
    w3, b3 = lin(ks[4], ks[5], hidden_dim, output_dim)
    return {"w1": w1, "b1": b1, "w2": w2, "b2": b2, "w3": w3, "b3": b3}


def reference_forward(x, p):
    h = jnp.maximum(x @ p["w1"] + p["b1"], 0.0)
    h = jnp.maximum(h @ p["w2"] + p["b2"], 0.0)
    return h @ p["w3"] + p["b3"]


if __name__ == "__main__":
    # Shapes consistent with MLPEncoder(input_dim=16, output_dim=8,
    # hidden_dim=32, hidden_layer=2, dropout=0).  B=1024 gives a grid of 2
    # batch tiles of 512 (exercises the pipeline and the v7x parallel axis)
    # while keeping total data tiny.
    B, Din, H, Dout = 1024, 16, 32, 8
    key = jax.random.PRNGKey(0)
    kx, kp = jax.random.split(key)
    x = jax.random.normal(kx, (B, Din), jnp.float32)
    params = init_params(kp, Din, H, Dout)

    out = jax.block_until_ready(mlp_encoder_forward(x, params))

    ref = reference_forward(x, params)
    assert out.shape == (B, Dout)
    # bf16 MXU operands (f32 accumulate) -> loosened tolerance vs f32 reference.
    assert jnp.allclose(out, ref, atol=2e-2, rtol=2e-2), float(
        jnp.max(jnp.abs(out - ref)))

    print("KERNEL_OK")
</pallas_src>

<mosaic_0001>
module attributes {stable_mosaic.version = 11 : i64} {
  func.func @mlp_kernel(%arg0: i32, %arg1: memref<512x128xbf16, #tpu.memory_space<vmem>>, %arg2: memref<128x128xbf16, #tpu.memory_space<vmem>>, %arg3: memref<1x128xf32, #tpu.memory_space<vmem>>, %arg4: memref<128x128xbf16, #tpu.memory_space<vmem>>, %arg5: memref<1x128xf32, #tpu.memory_space<vmem>>, %arg6: memref<128x128xbf16, #tpu.memory_space<vmem>>, %arg7: memref<1x128xf32, #tpu.memory_space<vmem>>, %arg8: memref<512x128xf32, #tpu.memory_space<vmem>>) attributes {dimension_semantics = [#tpu.dimension_semantics<parallel>], iteration_bounds = array<i64: 2>, scalar_prefetch = 0 : i64, scratch_operands = 0 : i64, tpu.core_type = #tpu.core_type<tc>, window_params = [{transform_indices = @transform_0, window_bounds = array<i64: 512, 128>}, {pipeline_mode = #tpu.pipeline_mode<synchronous>, transform_indices = @transform_1, window_bounds = array<i64: 128, 128>}, {pipeline_mode = #tpu.pipeline_mode<synchronous>, transform_indices = @transform_2, window_bounds = array<i64: 1, 128>}, {pipeline_mode = #tpu.pipeline_mode<synchronous>, transform_indices = @transform_3, window_bounds = array<i64: 128, 128>}, {pipeline_mode = #tpu.pipeline_mode<synchronous>, transform_indices = @transform_4, window_bounds = array<i64: 1, 128>}, {pipeline_mode = #tpu.pipeline_mode<synchronous>, transform_indices = @transform_5, window_bounds = array<i64: 128, 128>}, {pipeline_mode = #tpu.pipeline_mode<synchronous>, transform_indices = @transform_6, window_bounds = array<i64: 1, 128>}, {transform_indices = @transform_7, window_bounds = array<i64: 512, 128>}]} {
    %c0 = arith.constant 0 : index
    %c0_0 = arith.constant 0 : index
    %0 = vector.load %arg1[%c0, %c0_0] : memref<512x128xbf16, #tpu.memory_space<vmem>>, vector<512x128xbf16>
    %c0_1 = arith.constant 0 : index
    %c0_2 = arith.constant 0 : index
    %1 = vector.load %arg2[%c0_1, %c0_2] : memref<128x128xbf16, #tpu.memory_space<vmem>>, vector<128x128xbf16>
    %cst = arith.constant dense<0.000000e+00> : vector<512x128xf32>
    %2 = tpu.matmul %0, %1, %cst {dimension_numbers = #tpu.dot_dimension_numbers<[1], [0], [0], [1], [0, 0, 1, 1], [], []>} : vector<512x128xbf16>, vector<128x128xbf16>, vector<512x128xf32> -> vector<512x128xf32>
    %c0_3 = arith.constant 0 : index
    %c0_4 = arith.constant 0 : index
    %3 = vector.load %arg3[%c0_3, %c0_4] : memref<1x128xf32, #tpu.memory_space<vmem>>, vector<1x128xf32>
    %4 = vector.broadcast %3 : vector<1x128xf32> to vector<512x128xf32>
    %5 = arith.addf %2, %4 : vector<512x128xf32>
    %cst_5 = arith.constant 0.000000e+00 : f32
    %6 = vector.broadcast %cst_5 : f32 to vector<512x128xf32>
    %7 = arith.maximumf %5, %6 : vector<512x128xf32>
    %8 = arith.truncf %7 : vector<512x128xf32> to vector<512x128xbf16>
    %c0_6 = arith.constant 0 : index
    %c0_7 = arith.constant 0 : index
    %9 = vector.load %arg4[%c0_6, %c0_7] : memref<128x128xbf16, #tpu.memory_space<vmem>>, vector<128x128xbf16>
    %cst_8 = arith.constant dense<0.000000e+00> : vector<512x128xf32>
    %10 = tpu.matmul %8, %9, %cst_8 {dimension_numbers = #tpu.dot_dimension_numbers<[1], [0], [0], [1], [0, 0, 1, 1], [], []>} : vector<512x128xbf16>, vector<128x128xbf16>, vector<512x128xf32> -> vector<512x128xf32>
    %c0_9 = arith.constant 0 : index
    %c0_10 = arith.constant 0 : index
    %11 = vector.load %arg5[%c0_9, %c0_10] : memref<1x128xf32, #tpu.memory_space<vmem>>, vector<1x128xf32>
    %12 = vector.broadcast %11 : vector<1x128xf32> to vector<512x128xf32>
    %13 = arith.addf %10, %12 : vector<512x128xf32>
    %cst_11 = arith.constant 0.000000e+00 : f32
    %14 = vector.broadcast %cst_11 : f32 to vector<512x128xf32>
    %15 = arith.maximumf %13, %14 : vector<512x128xf32>
    %16 = arith.truncf %15 : vector<512x128xf32> to vector<512x128xbf16>
    %c0_12 = arith.constant 0 : index
    %c0_13 = arith.constant 0 : index
    %17 = vector.load %arg6[%c0_12, %c0_13] : memref<128x128xbf16, #tpu.memory_space<vmem>>, vector<128x128xbf16>
    %cst_14 = arith.constant dense<0.000000e+00> : vector<512x128xf32>
    %18 = tpu.matmul %16, %17, %cst_14 {dimension_numbers = #tpu.dot_dimension_numbers<[1], [0], [0], [1], [0, 0, 1, 1], [], []>} : vector<512x128xbf16>, vector<128x128xbf16>, vector<512x128xf32> -> vector<512x128xf32>
    %c0_15 = arith.constant 0 : index
    %c0_16 = arith.constant 0 : index
    %19 = vector.load %arg7[%c0_15, %c0_16] : memref<1x128xf32, #tpu.memory_space<vmem>>, vector<1x128xf32>
    %20 = vector.broadcast %19 : vector<1x128xf32> to vector<512x128xf32>
    %21 = arith.addf %18, %20 : vector<512x128xf32>
    %c0_17 = arith.constant 0 : index
    %c0_18 = arith.constant 0 : index
    %22 = vector.load %arg8[%c0_17, %c0_18] : memref<512x128xf32, #tpu.memory_space<vmem>>, vector<512x128xf32>
    tpu.vector_store %arg8[%c0_17, %c0_18], %21 {strides = array<i32>} : memref<512x128xf32, #tpu.memory_space<vmem>>, vector<512x128xf32>,
    return
  }
  func.func @transform_0(%arg0: i32) -> (i32, i32) {
    %c0_i32 = arith.constant 0 : i32
    %c0_i32_0 = arith.constant 0 : i32
    return %arg0, %c0_i32 : i32, i32
  }
  func.func @transform_1(%arg0: i32) -> (i32, i32) {
    %c0_i32 = arith.constant 0 : i32
    %c0_i32_0 = arith.constant 0 : i32
    %c0_i32_1 = arith.constant 0 : i32
    return %c0_i32, %c0_i32_0 : i32, i32
  }
  func.func @transform_2(%arg0: i32) -> (i32, i32) {
    %c0_i32 = arith.constant 0 : i32
    %c0_i32_0 = arith.constant 0 : i32
    %c0_i32_1 = arith.constant 0 : i32
    return %c0_i32, %c0_i32_0 : i32, i32
  }
  func.func @transform_3(%arg0: i32) -> (i32, i32) {
    %c0_i32 = arith.constant 0 : i32
    %c0_i32_0 = arith.constant 0 : i32
    %c0_i32_1 = arith.constant 0 : i32
    return %c0_i32, %c0_i32_0 : i32, i32
  }
  func.func @transform_4(%arg0: i32) -> (i32, i32) {
    %c0_i32 = arith.constant 0 : i32
    %c0_i32_0 = arith.constant 0 : i32
    %c0_i32_1 = arith.constant 0 : i32
    return %c0_i32, %c0_i32_0 : i32, i32
  }
  func.func @transform_5(%arg0: i32) -> (i32, i32) {
    %c0_i32 = arith.constant 0 : i32
    %c0_i32_0 = arith.constant 0 : i32
    %c0_i32_1 = arith.constant 0 : i32
    return %c0_i32, %c0_i32_0 : i32, i32
  }
  func.func @transform_6(%arg0: i32) -> (i32, i32) {
    %c0_i32 = arith.constant 0 : i32
    %c0_i32_0 = arith.constant 0 : i32
    %c0_i32_1 = arith.constant 0 : i32
    return %c0_i32, %c0_i32_0 : i32, i32
  }
  func.func @transform_7(%arg0: i32) -> (i32, i32) {
    %c0_i32 = arith.constant 0 : i32
    %c0_i32_0 = arith.constant 0 : i32
    return %arg0, %c0_i32 : i32, i32
  }
}

</mosaic_0001>

<llo_original>
// kernel: tpu_custom_call.1
$region0: #{tpu_custom_call.1}
  #allocation0 [shape = 'u32[]', space=smem, size = 0x4, offset = 0x4, fixed_abs, tag = 'smem constant byte address 0x4 - core index']
  #allocation1 [shape = 'u32[144,128]{1,0:T(1,128)}', space=vmem, size = 0x12000, scoped, tag = 'internal scratch']
  %s0 = inlined_call_operand.hbm [shape: bf16[1024,128], index: 0, kind: input, shape index: {}]
  %s1 = inlined_call_operand.hbm [shape: bf16[128,128], index: 1, kind: input, shape index: {}]
  %s2 = inlined_call_operand.vmem [shape: f32[1,128], index: 2, kind: input, shape index: {}]
  %s3 = inlined_call_operand.hbm [shape: bf16[128,128], index: 3, kind: input, shape index: {}]
  %s4 = inlined_call_operand.vmem [shape: f32[1,128], index: 4, kind: input, shape index: {}]
  %s5 = inlined_call_operand.hbm [shape: bf16[128,128], index: 5, kind: input, shape index: {}]
  %s6 = inlined_call_operand.vmem [shape: f32[1,128], index: 6, kind: input, shape index: {}]
  %s7 = inlined_call_operand.hbm [shape: f32[1024,128], index: 7, kind: output, shape index: {}]
  %s8 = sld [smem:[#allocation0]]
  $region77: #{tpu_custom_call.1} parent=0
    _
  %s10 = ssub.s32 1, %s8
  %s11 = scalar_select 0, %s10, %s8
  $region1: #{tpu_custom_call.1} parent=0
    #allocation2 [shape = 'u8[262144]{0}', space=vmem, size = 0x40000, scoped, tag = 'input window, operand 0']
    #allocation3 [shape = 's32[2]{0}', space=sflag, size = 0x8, scoped, tag = 'scoped memory for tpu_custom_call.1']
    #allocation4 [shape = 's32[2]{0}', space=sflag, size = 0x8, scoped, tag = 'scoped memory for tpu_custom_call.1']
    #allocation5 [shape = 'u8[32768]{0}', space=vmem, size = 0x8000, scoped, tag = 'input window, operand 1, single buffered']
    #allocation6 [shape = 's32[1]{0}', space=sflag, size = 0x4, scoped, tag = 'scoped memory for tpu_custom_call.1']
    #allocation7 [shape = 'u8[32768]{0}', space=vmem, size = 0x8000, scoped, tag = 'input window, operand 3, single buffered']
    #allocation8 [shape = 'u8[32768]{0}', space=vmem, size = 0x8000, scoped, tag = 'input window, operand 5, single buffered']
    #allocation9 [shape = 's32[1]{0}', space=sflag, size = 0x4, scoped, tag = 'scoped memory for tpu_custom_call.1']
    #allocation10 [shape = 'u8[524288]{0}', space=vmem, size = 0x80000, scoped, tag = 'output window, operand 0']
    %12 = vsyncpa [#allocation3], 0
    %s13 = scalar_lea.sflag [#allocation3], 1
    %14 = vsyncpa %s13, 0
    %15 = vsyncpa [#allocation6], 0
    %16 = vsyncpa [#allocation9], 0
    %17 = vsyncpa [#allocation4], 0
    %s18 = scalar_lea.sflag [#allocation4], 1
    %19 = vsyncpa %s18, 0
    loop: start=0, step=1, limit=4
    $region2: #{tpu_custom_call.1} parent=1 // loop_pre_header
      _
    $region3: #{tpu_custom_call.1} parent=1 // loop_header
      %s21 = sphi 0, %s25
      %p22 = scmp.ge.s32.totalorder %s21, 4
      %s31 = sphi 0, %s33
      %s34 = sphi 0, %s31
      %s35 = sphi 0, %s34
      %s51 = sphi 0, %s35
      %s55 = sphi 0, %s55
      %s57 = sphi 0, %s55
      %s58 = sphi 0, %s57
      %s72 = sphi 0, %s58
      %s76 = sphi 0, %s76
      %s78 = sphi 0, %s76
      %s79 = sphi 0, %s78
      %s93 = sphi 0, %s79
      %s97 = sphi 0, %s97
      %s99 = sphi 0, %s97
      %s100 = sphi 0, %s99
      %s114 = sphi 0, %s100
      %s118 = sphi 0, %s118
      %s120 = sphi 0, %s118
      %s121 = sphi 0, %s120
      %s135 = sphi 0, %s121
      %s139 = sphi 0, %s139
      %s141 = sphi 0, %s139
      %s142 = sphi 0, %s141
      %s156 = sphi 0, %s142
      %s160 = sphi 0, %s160
      %s162 = sphi 0, %s160
      %s163 = sphi 0, %s162
      %s177 = sphi 0, %s163
      %s183 = sphi 0, %s185
      %s186 = sphi 0, %s183
      %s187 = sphi 0, %s186
      %s203 = sphi 0, %s187
    $region4: #{tpu_custom_call.1} parent=1 // loop_header_branch
      %24 = sbr.rel (%p22) target = $region8
    $region5: #{tpu_custom_call.1} parent=1 // loop_body
      %s26 = ssub.s32 %s21, 1
      %s27 = ssub.s32 %s21, 2
      %s28 = sadd.s32 %s21, 1
      %s29 = ssub.s32 %s21, %s28
      %p30 = scmp.eq.s32.totalorder %s29, 0
      %s32 = sadd.s32 %s31, 1
      %s33 = scalar_select %p30, %s31, %s32
      %p36 = pneg %p30
      %p37 = scmp.eq.s32.totalorder %s21, 1
      %p38 = por %p36, %p37
      %p39 = scmp.ne.s32.totalorder %s31, %s34
      %p40 = scmp.eq.s32.totalorder %s21, 0
      %p41 = por %p39, %p40
      %p42 = scmp.ne.s32.totalorder %s31, %s34
      %p43 = scmp.eq.s32.totalorder %s26, 1
      %p44 = por %p42, %p43
      %p45 = scmp.ne.s32.totalorder %s34, %s35
      %p46 = scmp.eq.s32.totalorder %s26, 0
      %p47 = por %p45, %p46
      %p48 = scmp.ne.s32.totalorder %s34, %s35
      %p49 = scmp.eq.s32.totalorder %s27, 1
      %p50 = por %p48, %p49
      %p52 = scmp.ne.s32.totalorder %s35, %s51
      %p53 = scmp.eq.s32.totalorder %s27, 0
      %p54 = por %p52, %p53
      %s56 = sadd.s32 %s55, 1
      %p59 = scmp.eq.s32.totalorder %s21, 1
      %p60 = scmp.ne.s32.totalorder %s55, %s57
      %p61 = scmp.eq.s32.totalorder %s21, 0
      %p62 = por %p60, %p61
      %p63 = scmp.ne.s32.totalorder %s55, %s57
      %p64 = scmp.eq.s32.totalorder %s26, 1
      %p65 = por %p63, %p64
      %p66 = scmp.ne.s32.totalorder %s57, %s58
      %p67 = scmp.eq.s32.totalorder %s26, 0
      %p68 = por %p66, %p67
      %p69 = scmp.ne.s32.totalorder %s57, %s58
      %p70 = scmp.eq.s32.totalorder %s27, 1
      %p71 = por %p69, %p70
      %p73 = scmp.ne.s32.totalorder %s58, %s72
      %p74 = scmp.eq.s32.totalorder %s27, 0
      %p75 = por %p73, %p74
      %s77 = sadd.s32 %s76, 1
      %p80 = scmp.eq.s32.totalorder %s21, 1
      %p81 = scmp.ne.s32.totalorder %s76, %s78
      %p82 = scmp.eq.s32.totalorder %s21, 0
      %p83 = por %p81, %p82
      %p84 = scmp.ne.s32.totalorder %s76, %s78
      %p85 = scmp.eq.s32.totalorder %s26, 1
      %p86 = por %p84, %p85
      %p87 = scmp.ne.s32.totalorder %s78, %s79
      %p88 = scmp.eq.s32.totalorder %s26, 0
      %p89 = por %p87, %p88
      %p90 = scmp.ne.s32.totalorder %s78, %s79
      %p91 = scmp.eq.s32.totalorder %s27, 1
      %p92 = por %p90, %p91
      %p94 = scmp.ne.s32.totalorder %s79, %s93
      %p95 = scmp.eq.s32.totalorder %s27, 0
      %p96 = por %p94, %p95
      %s98 = sadd.s32 %s97, 1
      %p101 = scmp.eq.s32.totalorder %s21, 1
      %p102 = scmp.ne.s32.totalorder %s97, %s99
      %p103 = scmp.eq.s32.totalorder %s21, 0
      %p104 = por %p102, %p103
      %p105 = scmp.ne.s32.totalorder %s97, %s99
      %p106 = scmp.eq.s32.totalorder %s26, 1
      %p107 = por %p105, %p106
      %p108 = scmp.ne.s32.totalorder %s99, %s100
      %p109 = scmp.eq.s32.totalorder %s26, 0
      %p110 = por %p108, %p109
      %p111 = scmp.ne.s32.totalorder %s99, %s100
      %p112 = scmp.eq.s32.totalorder %s27, 1
      %p113 = por %p111, %p112
      %p115 = scmp.ne.s32.totalorder %s100, %s114
      %p116 = scmp.eq.s32.totalorder %s27, 0
      %p117 = por %p115, %p116
      %s119 = sadd.s32 %s118, 1
      %p122 = scmp.eq.s32.totalorder %s21, 1
      %p123 = scmp.ne.s32.totalorder %s118, %s120
      %p124 = scmp.eq.s32.totalorder %s21, 0
      %p125 = por %p123, %p124
      %p126 = scmp.ne.s32.totalorder %s118, %s120
      %p127 = scmp.eq.s32.totalorder %s26, 1
      %p128 = por %p126, %p127
      %p129 = scmp.ne.s32.totalorder %s120, %s121
      %p130 = scmp.eq.s32.totalorder %s26, 0
      %p131 = por %p129, %p130
      %p132 = scmp.ne.s32.totalorder %s120, %s121
      %p133 = scmp.eq.s32.totalorder %s27, 1
      %p134 = por %p132, %p133
      %p136 = scmp.ne.s32.totalorder %s121, %s135
      %p137 = scmp.eq.s32.totalorder %s27, 0
      %p138 = por %p136, %p137
      %s140 = sadd.s32 %s139, 1
      %p143 = scmp.eq.s32.totalorder %s21, 1
      %p144 = scmp.ne.s32.totalorder %s139, %s141
      %p145 = scmp.eq.s32.totalorder %s21, 0
      %p146 = por %p144, %p145
      %p147 = scmp.ne.s32.totalorder %s139, %s141
      %p148 = scmp.eq.s32.totalorder %s26, 1
      %p149 = por %p147, %p148
      %p150 = scmp.ne.s32.totalorder %s141, %s142
      %p151 = scmp.eq.s32.totalorder %s26, 0
      %p152 = por %p150, %p151
      %p153 = scmp.ne.s32.totalorder %s141, %s142
      %p154 = scmp.eq.s32.totalorder %s27, 1
      %p155 = por %p153, %p154
      %p157 = scmp.ne.s32.totalorder %s142, %s156
      %p158 = scmp.eq.s32.totalorder %s27, 0
      %p159 = por %p157, %p158
      %s161 = sadd.s32 %s160, 1
      %p164 = scmp.eq.s32.totalorder %s21, 1
      %p165 = scmp.ne.s32.totalorder %s160, %s162
      %p166 = scmp.eq.s32.totalorder %s21, 0
      %p167 = por %p165, %p166
      %p168 = scmp.ne.s32.totalorder %s160, %s162
      %p169 = scmp.eq.s32.totalorder %s26, 1
      %p170 = por %p168, %p169
      %p171 = scmp.ne.s32.totalorder %s162, %s163
      %p172 = scmp.eq.s32.totalorder %s26, 0
      %p173 = por %p171, %p172
      %p174 = scmp.ne.s32.totalorder %s162, %s163
      %p175 = scmp.eq.s32.totalorder %s27, 1
      %p176 = por %p174, %p175
      %p178 = scmp.ne.s32.totalorder %s163, %s177
      %p179 = scmp.eq.s32.totalorder %s27, 0
      %p180 = por %p178, %p179
      %s181 = ssub.s32 %s21, %s28
      %p182 = scmp.eq.s32.totalorder %s181, 0
      %s184 = sadd.s32 %s183, 1
      %s185 = scalar_select %p182, %s183, %s184
      %p188 = pneg %p182
      %p189 = scmp.eq.s32.totalorder %s21, 1
      %p190 = por %p188, %p189
      %p191 = scmp.ne.s32.totalorder %s183, %s186
      %p192 = scmp.eq.s32.totalorder %s21, 0
      %p193 = por %p191, %p192
      %p194 = scmp.ne.s32.totalorder %s183, %s186
      %p195 = scmp.eq.s32.totalorder %s26, 1
      %p196 = por %p194, %p195
      %p197 = scmp.ne.s32.totalorder %s186, %s187
      %p198 = scmp.eq.s32.totalorder %s26, 0
      %p199 = por %p197, %p198
      %p200 = scmp.ne.s32.totalorder %s186, %s187
      %p201 = scmp.eq.s32.totalorder %s27, 1
      %p202 = por %p200, %p201
      %p204 = scmp.ne.s32.totalorder %s187, %s203
      %p205 = scmp.eq.s32.totalorder %s27, 0
      %p206 = por %p204, %p205
      %p207 = scmp.le.s32.totalorder 1, %s21
      %p208 = scmp.lt.s32.totalorder %s21, 3
      %p209 = pnand %p207, %p208
      %p210 = pneg %p209
      // Predicated region
      $region9: #{tpu_custom_call.1} parent=5 // pred_check
        _
      $region10: #{tpu_custom_call.1} parent=5 // pred_check_branch
        %212 = sbr.rel (%p209) target = $region12
      $region11: #{tpu_custom_call.1} parent=5 // pred_region
        %s213 = ssub.s32 %s21, 1
        // Predicated region
        $region13: #{tpu_custom_call.1} parent=11 // pred_check
          %p214 = pneg %p68
        $region14: #{tpu_custom_call.1} parent=11 // pred_check_branch
          %216 = sbr.rel (%p214) target = $region16
        $region15: #{tpu_custom_call.1} parent=11 // pred_region
          %s218 = ssub.s32 1024, 1024
          %219 = vsyncadd [#allocation6], %s218
          %s220 = sshll.u32 [#allocation5], 4
          %s221 = int_to_ptr.vmem [resolvable:$true] %s220
          %226 = dma.hbm_to_vmem [thread:$0]  %s1, 1024, %s221, [#allocation6], 64, 64, 4
        $region16: #{tpu_custom_call.1} parent=11 // pred_fallthru
          _
        // Predicated region
        $region17: #{tpu_custom_call.1} parent=11 // pred_check
          %p227 = pneg %p89
        $region18: #{tpu_custom_call.1} parent=11 // pred_check_branch
          %229 = sbr.rel (%p227) target = $region20
        $region19: #{tpu_custom_call.1} parent=11 // pred_region
          _
        $region20: #{tpu_custom_call.1} parent=11 // pred_fallthru
          _
        // Predicated region
        $region21: #{tpu_custom_call.1} parent=11 // pred_check
          %p230 = pneg %p110
        $region22: #{tpu_custom_call.1} parent=11 // pred_check_branch
          %232 = sbr.rel (%p230) target = $region24
        $region23: #{tpu_custom_call.1} parent=11 // pred_region
          %s234 = ssub.s32 1024, 1024
          %235 = vsyncadd [#allocation6], %s234
          %s236 = sshll.u32 [#allocation7], 4
          %s237 = int_to_ptr.vmem [resolvable:$true] %s236
          %242 = dma.hbm_to_vmem [thread:$0]  %s3, 1024, %s237, [#allocation6], 64, 64, 4
        $region24: #{tpu_custom_call.1} parent=11 // pred_fallthru
          _
        // Predicated region
        $region25: #{tpu_custom_call.1} parent=11 // pred_check
          %p243 = pneg %p131
        $region26: #{tpu_custom_call.1} parent=11 // pred_check_branch
          %245 = sbr.rel (%p243) target = $region28
        $region27: #{tpu_custom_call.1} parent=11 // pred_region
          _
        $region28: #{tpu_custom_call.1} parent=11 // pred_fallthru
          _
        // Predicated region
        $region29: #{tpu_custom_call.1} parent=11 // pred_check
          %p246 = pneg %p152
        $region30: #{tpu_custom_call.1} parent=11 // pred_check_branch
          %248 = sbr.rel (%p246) target = $region32
        $region31: #{tpu_custom_call.1} parent=11 // pred_region
          %s250 = ssub.s32 1024, 1024
          %251 = vsyncadd [#allocation9], %s250
          %s252 = sshll.u32 [#allocation8], 4
          %s253 = int_to_ptr.vmem [resolvable:$true] %s252
          %258 = dma.hbm_to_vmem [thread:$0]  %s5, 1024, %s253, [#allocation9], 64, 64, 4
        $region32: #{tpu_custom_call.1} parent=11 // pred_fallthru
          _
        // Predicated region
        $region33: #{tpu_custom_call.1} parent=11 // pred_check
          %p259 = pneg %p173
        $region34: #{tpu_custom_call.1} parent=11 // pred_check_branch
          %261 = sbr.rel (%p259) target = $region36
        $region35: #{tpu_custom_call.1} parent=11 // pred_region
          _
        $region36: #{tpu_custom_call.1} parent=11 // pred_fallthru
          _
      $region12: #{tpu_custom_call.1} parent=5 // pred_fallthru
        _
      %p262 = scmp.lt.s32.totalorder %s21, 2
      // Predicated region
      $region37: #{tpu_custom_call.1} parent=5 // pred_check
        %p263 = pneg %p262
      $region38: #{tpu_custom_call.1} parent=5 // pred_check_branch
        %265 = sbr.rel (%p263) target = $region40
      $region39: #{tpu_custom_call.1} parent=5 // pred_region
        // Predicated region
        $region41: #{tpu_custom_call.1} parent=39 // pred_check
          %p266 = pneg %p41
        $region42: #{tpu_custom_call.1} parent=39 // pred_check_branch
          %268 = sbr.rel (%p266) target = $region44
        $region43: #{tpu_custom_call.1} parent=39 // pred_region
          %s269 = sand.u32 %s31, 1
          %s270 = scalar_lea.sflag [#allocation3], %s269
          %s271 = sand.u32 %s31, 1
          %s272 = smul.addr %s271, 256
          %s273 = scalar_lea.vmem [#allocation2], %s272
          %s274 = smul.u32 64, %s21
          %s276 = ssub.s32 4096, 4096
          %277 = vsyncadd %s270, %s276
          %s278 = smul.addr %s274, 64
          %s279 = scalar_lea.hbm %s0, %s278
          %s280 = sshll.u32 %s273, 4
          %s281 = int_to_ptr.vmem [resolvable:$true] %s280
          %286 = dma.hbm_to_vmem [thread:$0]  %s279, 4096, %s281, %s270, 64, 64, 4
        $region44: #{tpu_custom_call.1} parent=39 // pred_fallthru
          _
      $region40: #{tpu_custom_call.1} parent=5 // pred_fallthru
        _
      %p287 = scmp.le.s32.totalorder 1, %s21
      %p288 = scmp.lt.s32.totalorder %s21, 3
      %p289 = pnand %p287, %p288
      %p290 = pneg %p289
      // Predicated region
      $region45: #{tpu_custom_call.1} parent=5 // pred_check
        _
      $region46: #{tpu_custom_call.1} parent=5 // pred_check_branch
        %292 = sbr.rel (%p289) target = $region48
      $region47: #{tpu_custom_call.1} parent=5 // pred_region
        %s293 = ssub.s32 %s21, 1
        %s294 = sand.u32 %s34, 1
        %s295 = scalar_lea.sflag [#allocation3], %s294
        %s296 = sand.u32 %s34, 1
        %s297 = smul.addr %s296, 256
        %s298 = scalar_lea.vmem [#allocation2], %s297
        // Predicated region
        $region49: #{tpu_custom_call.1} parent=47 // pred_check
          %p299 = pneg %p47
        $region50: #{tpu_custom_call.1} parent=47 // pred_check_branch
          %301 = sbr.rel (%p299) target = $region52
        $region51: #{tpu_custom_call.1} parent=47 // pred_region
          %302 = dma.done %s295, 4096
        $region52: #{tpu_custom_call.1} parent=47 // pred_fallthru
          _
        // Predicated region
        $region53: #{tpu_custom_call.1} parent=47 // pred_check
          %p303 = pneg %p68
        $region54: #{tpu_custom_call.1} parent=47 // pred_check_branch
          %305 = sbr.rel (%p303) target = $region56
        $region55: #{tpu_custom_call.1} parent=47 // pred_region
          %306 = dma.done [#allocation6], 1024
        $region56: #{tpu_custom_call.1} parent=47 // pred_fallthru
          _
        // Predicated region
        $region57: #{tpu_custom_call.1} parent=47 // pred_check
          %p307 = pneg %p110
        $region58: #{tpu_custom_call.1} parent=47 // pred_check_branch
          %309 = sbr.rel (%p307) target = $region60
        $region59: #{tpu_custom_call.1} parent=47 // pred_region
          %310 = dma.done [#allocation6], 1024
        $region60: #{tpu_custom_call.1} parent=47 // pred_fallthru
          _
        // Predicated region
        $region61: #{tpu_custom_call.1} parent=47 // pred_check
          %p311 = pneg %p152
        $region62: #{tpu_custom_call.1} parent=47 // pred_check_branch
          %313 = sbr.rel (%p311) target = $region64
        $region63: #{tpu_custom_call.1} parent=47 // pred_region
          %314 = dma.done [#allocation9], 1024
        $region64: #{tpu_custom_call.1} parent=47 // pred_fallthru
          _
        %s315 = sand.u32 %s34, 1
        %s316 = scalar_lea.sflag [#allocation3], %s315
        %s317 = sand.u32 %s34, 1
        %s318 = smul.addr %s317, 256
        %s319 = scalar_lea.vmem [#allocation2], %s318
        %p320 = pneg %p47
        %p321 = pneg %p44
        %p322 = pneg %p68
        %p323 = pneg %p65
        %p324 = pneg %p89
        %p325 = pneg %p86
        %p326 = pneg %p110
        %p327 = pneg %p107
        %p328 = pneg %p131
        %p329 = pneg %p128
        %p330 = pneg %p152
        %p331 = pneg %p149
        %p332 = pneg %p173
        %p333 = pneg %p170
        %p334 = pneg %p199
        %p335 = pneg %p196
        %s336 = sand.u32 %s186, 1
        %s337 = scalar_lea.sflag [#allocation4], %s336
        %s338 = sand.u32 %s186, 1
        %s339 = smul.addr %s338, 512
        %s340 = scalar_lea.vmem [#allocation10], %s339
        %s341 = smul.u32 64, %s26
        %s342 = smul.u32 64, %s26
        %v344 = vld [vmem:[%s298] sm:$0xf]
        %v345 = vld [vmem:[%s298 + $0x4] sm:$0xf]
        %v346 = vld [vmem:[%s298 + $0x8] sm:$0xf]
        %v347 = vld [vmem:[%s298 + $0xc] sm:$0xf]
        %v348 = vld [vmem:[%s298 + $0x10] sm:$0xf]
        %v349 = vld [vmem:[%s298 + $0x14] sm:$0xf]
        %v350 = vld [vmem:[%s298 + $0x18] sm:$0xf]
        %v351 = vld [vmem:[%s298 + $0x1c] sm:$0xf]
        %v352 = vld [vmem:[%s298 + $0x20] sm:$0xf]
        %v353 = vld [vmem:[%s298 + $0x24] sm:$0xf]
        %v354 = vld [vmem:[%s298 + $0x28] sm:$0xf]
        %v355 = vld [vmem:[%s298 + $0x2c] sm:$0xf]
        %v356 = vld [vmem:[%s298 + $0x30] sm:$0xf]
        %v357 = vld [vmem:[%s298 + $0x34] sm:$0xf]
        %v358 = vld [vmem:[%s298 + $0x38] sm:$0xf]
        %v359 = vld [vmem:[%s298 + $0x3c] sm:$0xf]
        %v360 = vld [vmem:[%s298 + $0x40] sm:$0xf]
        %v361 = vld [vmem:[%s298 + $0x44] sm:$0xf]
        %v362 = vld [vmem:[%s298 + $0x48] sm:$0xf]
        %v363 = vld [vmem:[%s298 + $0x4c] sm:$0xf]
        %v364 = vld [vmem:[%s298 + $0x50] sm:$0xf]
        %v365 = vld [vmem:[%s298 + $0x54] sm:$0xf]
        %v366 = vld [vmem:[%s298 + $0x58] sm:$0xf]
        %v367 = vld [vmem:[%s298 + $0x5c] sm:$0xf]
        %v368 = vld [vmem:[%s298 + $0x60] sm:$0xf]
        %v369 = vld [vmem:[%s298 + $0x64] sm:$0xf]
        %v370 = vld [vmem:[%s298 + $0x68] sm:$0xf]
        %v371 = vld [vmem:[%s298 + $0x6c] sm:$0xf]
        %v372 = vld [vmem:[%s298 + $0x70] sm:$0xf]
        %v373 = vld [vmem:[%s298 + $0x74] sm:$0xf]
        %v374 = vld [vmem:[%s298 + $0x78] sm:$0xf]
        %v375 = vld [vmem:[%s298 + $0x7c] sm:$0xf]
        %v376 = vld [vmem:[%s298 + $0x80] sm:$0xf]
        %v377 = vld [vmem:[%s298 + $0x84] sm:$0xf]
        %v378 = vld [vmem:[%s298 + $0x88] sm:$0xf]
        %v379 = vld [vmem:[%s298 + $0x8c] sm:$0xf]
        %v380 = vld [vmem:[%s298 + $0x90] sm:$0xf]
        %v381 = vld [vmem:[%s298 + $0x94] sm:$0xf]
        %v382 = vld [vmem:[%s298 + $0x98] sm:$0xf]
        %v383 = vld [vmem:[%s298 + $0x9c] sm:$0xf]
        %v384 = vld [vmem:[%s298 + $0xa0] sm:$0xf]
        %v385 = vld [vmem:[%s298 + $0xa4] sm:$0xf]
        %v386 = vld [vmem:[%s298 + $0xa8] sm:$0xf]
        %v387 = vld [vmem:[%s298 + $0xac] sm:$0xf]
        %v388 = vld [vmem:[%s298 + $0xb0] sm:$0xf]
        %v389 = vld [vmem:[%s298 + $0xb4] sm:$0xf]
        %v390 = vld [vmem:[%s298 + $0xb8] sm:$0xf]
        %v391 = vld [vmem:[%s298 + $0xbc] sm:$0xf]
        %v392 = vld [vmem:[%s298 + $0xc0] sm:$0xf]
        %v393 = vld [vmem:[%s298 + $0xc4] sm:$0xf]
        %v394 = vld [vmem:[%s298 + $0xc8] sm:$0xf]
        %v395 = vld [vmem:[%s298 + $0xcc] sm:$0xf]
        %v396 = vld [vmem:[%s298 + $0xd0] sm:$0xf]
        %v397 = vld [vmem:[%s298 + $0xd4] sm:$0xf]
        %v398 = vld [vmem:[%s298 + $0xd8] sm:$0xf]
        %v399 = vld [vmem:[%s298 + $0xdc] sm:$0xf]
        %v400 = vld [vmem:[%s298 + $0xe0] sm:$0xf]
        %v401 = vld [vmem:[%s298 + $0xe4] sm:$0xf]
        %v402 = vld [vmem:[%s298 + $0xe8] sm:$0xf]
        %v403 = vld [vmem:[%s298 + $0xec] sm:$0xf]
        %v404 = vld [vmem:[%s298 + $0xf0] sm:$0xf]
        %v405 = vld [vmem:[%s298 + $0xf4] sm:$0xf]
        %v406 = vld [vmem:[%s298 + $0xf8] sm:$0xf]
        %v407 = vld [vmem:[%s298 + $0xfc] sm:$0xf]
        %v408 = vld [vmem:[#allocation5] sm:$0xf]
        %v409 = vld [vmem:[#allocation5 + $0x4] sm:$0xf]
        %v410 = vld [vmem:[#allocation5 + $0x8] sm:$0xf]
        %v411 = vld [vmem:[#allocation5 + $0xc] sm:$0xf]
        %v412 = vld [vmem:[#allocation5 + $0x10] sm:$0xf]
        %v413 = vld [vmem:[#allocation5 + $0x14] sm:$0xf]
        %v414 = vld [vmem:[#allocation5 + $0x18] sm:$0xf]
        %v415 = vld [vmem:[#allocation5 + $0x1c] sm:$0xf]
        %v416 = vld [vmem:[#allocation5 + $0x20] sm:$0xf]
        %v417 = vld [vmem:[#allocation5 + $0x24] sm:$0xf]
        %v418 = vld [vmem:[#allocation5 + $0x28] sm:$0xf]
        %v419 = vld [vmem:[#allocation5 + $0x2c] sm:$0xf]
        %v420 = vld [vmem:[#allocation5 + $0x30] sm:$0xf]
        %v421 = vld [vmem:[#allocation5 + $0x34] sm:$0xf]
        %v422 = vld [vmem:[#allocation5 + $0x38] sm:$0xf]
        %v423 = vld [vmem:[#allocation5 + $0x3c] sm:$0xf]
        %v424 = vld [vmem:[%s2] sm:$0x1]
        %v426 = vlaneseq
        %v427 = vshrl.u32 %v426, 7
        %v428 = vsub.s32 0, %v427
        %v429 = vrot.slane %v424, %v428
        %v495 = vunpack.c.l.b16 %v344
        %v496 = vunpack.c.l.b16 %v345
        %v497 = vunpack.c.l.b16 %v346
        %v498 = vunpack.c.l.b16 %v347
        %v499 = vunpack.c.l.b16 %v348
        %v500 = vunpack.c.l.b16 %v349
        %v501 = vunpack.c.l.b16 %v350
        %v502 = vunpack.c.l.b16 %v351
        %v503 = vunpack.c.l.b16 %v352
        %v504 = vunpack.c.l.b16 %v353
        %v505 = vunpack.c.l.b16 %v354
        %v506 = vunpack.c.l.b16 %v355
        %v507 = vunpack.c.l.b16 %v356
        %v508 = vunpack.c.l.b16 %v357
        %v509 = vunpack.c.l.b16 %v358
        %v510 = vunpack.c.l.b16 %v359
        %v511 = vunpack.c.l.b16 %v360
        %v512 = vunpack.c.l.b16 %v361
        %v513 = vunpack.c.l.b16 %v362
        %v514 = vunpack.c.l.b16 %v363
        %v515 = vunpack.c.l.b16 %v364
        %v516 = vunpack.c.l.b16 %v365
        %v517 = vunpack.c.l.b16 %v366
        %v518 = vunpack.c.l.b16 %v367
        %v519 = vunpack.c.l.b16 %v368
        %v520 = vunpack.c.l.b16 %v369
        %v521 = vunpack.c.l.b16 %v370
        %v522 = vunpack.c.l.b16 %v371
        %v523 = vunpack.c.l.b16 %v372
        %v524 = vunpack.c.l.b16 %v373
        %v525 = vunpack.c.l.b16 %v374
        %v526 = vunpack.c.l.b16 %v375
        %v527 = vunpack.c.l.b16 %v376
        %v528 = vunpack.c.l.b16 %v377
        %v529 = vunpack.c.l.b16 %v378
        %v530 = vunpack.c.l.b16 %v379
        %v531 = vunpack.c.l.b16 %v380
        %v532 = vunpack.c.l.b16 %v381
        %v533 = vunpack.c.l.b16 %v382
        %v534 = vunpack.c.l.b16 %v383
        %v535 = vunpack.c.l.b16 %v384
        %v536 = vunpack.c.l.b16 %v385
        %v537 = vunpack.c.l.b16 %v386
        %v538 = vunpack.c.l.b16 %v387
        %v539 = vunpack.c.l.b16 %v388
        %v540 = vunpack.c.l.b16 %v389
        %v541 = vunpack.c.l.b16 %v390
        %v542 = vunpack.c.l.b16 %v391
        %v543 = vunpack.c.l.b16 %v392
        %v544 = vunpack.c.l.b16 %v393
        %v545 = vunpack.c.l.b16 %v394
        %v546 = vunpack.c.l.b16 %v395
        %v547 = vunpack.c.l.b16 %v396
        %v548 = vunpack.c.l.b16 %v397
        %v549 = vunpack.c.l.b16 %v398
        %v550 = vunpack.c.l.b16 %v399
        %v551 = vunpack.c.l.b16 %v400
        %v552 = vunpack.c.l.b16 %v401
        %v553 = vunpack.c.l.b16 %v402
        %v554 = vunpack.c.l.b16 %v403
        %v555 = vunpack.c.l.b16 %v404
        %v556 = vunpack.c.l.b16 %v405
        %v557 = vunpack.c.l.b16 %v406
        %v558 = vunpack.c.l.b16 %v407
        %v559 = vpack.c.b16 %v496, %v495
        %v560 = vpack.c.b16 %v498, %v497
        %v561 = vpack.c.b16 %v500, %v499
        %v562 = vpack.c.b16 %v502, %v501
        %v563 = vpack.c.b16 %v504, %v503
        %v564 = vpack.c.b16 %v506, %v505
        %v565 = vpack.c.b16 %v508, %v507
        %v566 = vpack.c.b16 %v510, %v509
        %v567 = vpack.c.b16 %v512, %v511
        %v568 = vpack.c.b16 %v514, %v513
        %v569 = vpack.c.b16 %v516, %v515
        %v570 = vpack.c.b16 %v518, %v517
        %v571 = vpack.c.b16 %v520, %v519
        %v572 = vpack.c.b16 %v522, %v521
        %v573 = vpack.c.b16 %v524, %v523
        %v574 = vpack.c.b16 %v526, %v525
        %v575 = vpack.c.b16 %v528, %v527
        %v576 = vpack.c.b16 %v530, %v529
        %v577 = vpack.c.b16 %v532, %v531
        %v578 = vpack.c.b16 %v534, %v533
        %v579 = vpack.c.b16 %v536, %v535
        %v580 = vpack.c.b16 %v538, %v537
        %v581 = vpack.c.b16 %v540, %v539
        %v582 = vpack.c.b16 %v542, %v541
        %v583 = vpack.c.b16 %v544, %v543
        %v584 = vpack.c.b16 %v546, %v545
        %v585 = vpack.c.b16 %v548, %v547
        %v586 = vpack.c.b16 %v550, %v549
        %v587 = vpack.c.b16 %v552, %v551
        %v588 = vpack.c.b16 %v554, %v553
        %v589 = vpack.c.b16 %v556, %v555
        %v590 = vpack.c.b16 %v558, %v557
        %v639 = vunpack.c.l.b16 %v408
        %v640 = vunpack.c.l.b16 %v409
        %v641 = vunpack.c.l.b16 %v410
        %v642 = vunpack.c.l.b16 %v411
        %v643 = vunpack.c.l.b16 %v412
        %v644 = vunpack.c.l.b16 %v413
        %v645 = vunpack.c.l.b16 %v414
        %v646 = vunpack.c.l.b16 %v415
        %v647 = vunpack.c.l.b16 %v416
        %v648 = vunpack.c.l.b16 %v417
        %v649 = vunpack.c.l.b16 %v418
        %v650 = vunpack.c.l.b16 %v419
        %v651 = vunpack.c.l.b16 %v420
        %v652 = vunpack.c.l.b16 %v421
        %v653 = vunpack.c.l.b16 %v422
        %v654 = vunpack.c.l.b16 %v423
        %v655 = vpack.c.b16 %v640, %v639
        %v656 = vpack.c.b16 %v642, %v641
        %v657 = vpack.c.b16 %v644, %v643
        %v658 = vpack.c.b16 %v646, %v645
        %v659 = vpack.c.b16 %v648, %v647
        %v660 = vpack.c.b16 %v650, %v649
        %v661 = vpack.c.b16 %v652, %v651
        %v662 = vpack.c.b16 %v654, %v653
        %671 = vmatprep.subr.bf16.mxu0 0
        %672 = vmatpush1.bf16.msra.mxu0 %v655
        %673 = vmatprep.subr.bf16.mxu0 0
        %674 = vmatpush1.bf16.msra.mxu0 %v656
        %675 = vmatprep.subr.bf16.mxu0 0
        %676 = vmatpush1.bf16.msra.mxu0 %v657
        %677 = vmatprep.subr.bf16.mxu0 0
        %678 = vmatpush1.bf16.msra.mxu0 %v658
        %679 = vmatprep.subr.bf16.mxu0 0
        %680 = vmatpush1.bf16.msra.mxu0 %v659
        %681 = vmatprep.subr.bf16.mxu0 0
        %682 = vmatpush1.bf16.msra.mxu0 %v660
        %683 = vmatprep.subr.bf16.mxu0 0
        %684 = vmatpush1.bf16.msra.mxu0 %v661
        %685 = vmatprep.subr.bf16.mxu0 0
        %686 = vmatpush1.bf16.msra.mxu0 %v662
        %687 = vmatprep.subr.bf16.mxu0 0
        %688 = vmatpush1.bf16.msra.mxu0 0
        %689 = vmatprep.subr.bf16.mxu0 0
        %690 = vmatpush1.bf16.msra.mxu0 0
        %691 = vmatprep.subr.bf16.mxu0 0
        %692 = vmatpush1.bf16.msra.mxu0 0
        %693 = vmatprep.subr.bf16.mxu0 0
        %694 = vmatpush1.bf16.msra.mxu0 0
        %695 = vmatprep.subr.bf16.mxu0 0
        %696 = vmatpush1.bf16.msra.mxu0 0
        %697 = vmatprep.subr.bf16.mxu0 0
        %698 = vmatpush1.bf16.msra.mxu0 0
        %699 = vmatprep.subr.bf16.mxu0 0
        %700 = vmatpush1.bf16.msra.mxu0 0
        %701 = vmatprep.subr.bf16.mxu0 0
        %702 = vmatpush1.bf16.msra.mxu0 0
        %703 = vmatprep.mubr.bf16.mxu0 0
        %704 = vmatmul.mubr.bf16.gmra.mrb[0].mxu0 %v559
        %v705 = vpop.f32.mrb[0].mxu0
        %v706 = vadd.f32 %v429, %v705
        %v707 = vpop.f32.mrb[0].mxu0
        %v708 = vpop.f32.mrb[0].mxu0
        %v709 = vadd.f32 %v429, %v708
        %v710 = vpop.f32.mrb[0].mxu0
        %711 = vmatprep.mubr.bf16.mxu0 0
        %712 = vmatmul.mubr.bf16.gmra.mrb[0].mxu0 %v560
        %v713 = vpop.f32.mrb[0].mxu0
        %v714 = vadd.f32 %v429, %v713
        %v715 = vpop.f32.mrb[0].mxu0
        %v716 = vpop.f32.mrb[0].mxu0
        %v717 = vadd.f32 %v429, %v716
        %v718 = vpop.f32.mrb[0].mxu0
        %719 = vmatprep.mubr.bf16.mxu0 0
        %720 = vmatmul.mubr.bf16.gmra.mrb[0].mxu0 %v561
        %v721 = vpop.f32.mrb[0].mxu0
        %v722 = vadd.f32 %v429, %v721
        %v723 = vpop.f32.mrb[0].mxu0
        %v724 = vpop.f32.mrb[0].mxu0
        %v725 = vadd.f32 %v429, %v724
        %v726 = vpop.f32.mrb[0].mxu0
        %727 = vmatprep.mubr.bf16.mxu0 0
        %728 = vmatmul.mubr.bf16.gmra.mrb[0].mxu0 %v562
        %v729 = vpop.f32.mrb[0].mxu0
        %v730 = vadd.f32 %v429, %v729
        %v731 = vpop.f32.mrb[0].mxu0
        %v732 = vpop.f32.mrb[0].mxu0
        %v733 = vadd.f32 %v429, %v732
        %v734 = vpop.f32.mrb[0].mxu0
        %735 = vmatprep.mubr.bf16.mxu0 0
        %736 = vmatmul.mubr.bf16.gmra.mrb[0].mxu0 %v563
        %v737 = vpop.f32.mrb[0].mxu0
        %v738 = vadd.f32 %v429, %v737
        %v739 = vpop.f32.mrb[0].mxu0
        %v740 = vpop.f32.mrb[0].mxu0
        %v741 = vadd.f32 %v429, %v740
        %v742 = vpop.f32.mrb[0].mxu0
        %743 = vmatprep.mubr.bf16.mxu0 0
        %744 = vmatmul.mubr.bf16.gmra.mrb[0].mxu0 %v564
        %v745 = vpop.f32.mrb[0].mxu0
        %v746 = vadd.f32 %v429, %v745
        %v747 = vpop.f32.mrb[0].mxu0
        %v748 = vpop.f32.mrb[0].mxu0
        %v749 = vadd.f32 %v429, %v748
        %v750 = vpop.f32.mrb[0].mxu0
        %751 = vmatprep.mubr.bf16.mxu0 0
        %752 = vmatmul.mubr.bf16.gmra.mrb[0].mxu0 %v565
        %v753 = vpop.f32.mrb[0].mxu0
        %v754 = vadd.f32 %v429, %v753
        %v755 = vpop.f32.mrb[0].mxu0
        %v756 = vpop.f32.mrb[0].mxu0
        %v757 = vadd.f32 %v429, %v756
        %v758 = vpop.f32.mrb[0].mxu0
        %759 = vmatprep.mubr.bf16.mxu0 0
        %760 = vmatmul.mubr.bf16.gmra.mrb[0].mxu0 %v566
        %v761 = vpop.f32.mrb[0].mxu0
        %v762 = vadd.f32 %v429, %v761
        %v763 = vpop.f32.mrb[0].mxu0
        %v764 = vpop.f32.mrb[0].mxu0
        %v765 = vadd.f32 %v429, %v764
        %v766 = vpop.f32.mrb[0].mxu0
        %767 = vmatprep.mubr.bf16.mxu0 0
        %768 = vmatmul.mubr.bf16.gmra.mrb[0].mxu0 %v567
        %v769 = vpop.f32.mrb[0].mxu0
        %v770 = vadd.f32 %v429, %v769
        %v771 = vpop.f32.mrb[0].mxu0
        %v772 = vpop.f32.mrb[0].mxu0
        %v773 = vadd.f32 %v429, %v772
        %v774 = vpop.f32.mrb[0].mxu0
        %775 = vmatprep.mubr.bf16.mxu0 0
        %776 = vmatmul.mubr.bf16.gmra.mrb[0].mxu0 %v568
        %v777 = vpop.f32.mrb[0].mxu0
        %v778 = vadd.f32 %v429, %v777
        %v779 = vpop.f32.mrb[0].mxu0
        %v780 = vpop.f32.mrb[0].mxu0
        %v781 = vadd.f32 %v429, %v780
        %v782 = vpop.f32.mrb[0].mxu0
        %783 = vmatprep.mubr.bf16.mxu0 0
        %784 = vmatmul.mubr.bf16.gmra.mrb[0].mxu0 %v569
        %v785 = vpop.f32.mrb[0].mxu0
        %v786 = vadd.f32 %v429, %v785
        %v787 = vpop.f32.mrb[0].mxu0
        %v788 = vpop.f32.mrb[0].mxu0
        %v789 = vadd.f32 %v429, %v788
        %v790 = vpop.f32.mrb[0].mxu0
        %791 = vmatprep.mubr.bf16.mxu0 0
        %792 = vmatmul.mubr.bf16.gmra.mrb[0].mxu0 %v570
        %v793 = vpop.f32.mrb[0].mxu0
        %v794 = vadd.f32 %v429, %v793
        %v795 = vpop.f32.mrb[0].mxu0
        %v796 = vpop.f32.mrb[0].mxu0
        %v797 = vadd.f32 %v429, %v796
        %v798 = vpop.f32.mrb[0].mxu0
        %799 = vmatprep.mubr.bf16.mxu0 0
        %800 = vmatmul.mubr.bf16.gmra.mrb[0].mxu0 %v571
        %v801 = vpop.f32.mrb[0].mxu0
        %v802 = vadd.f32 %v429, %v801
        %v803 = vpop.f32.mrb[0].mxu0
        %v804 = vpop.f32.mrb[0].mxu0
        %v805 = vadd.f32 %v429, %v804
        %v806 = vpop.f32.mrb[0].mxu0
        %807 = vmatprep.mubr.bf16.mxu0 0
        %808 = vmatmul.mubr.bf16.gmra.mrb[0].mxu0 %v572
        %v809 = vpop.f32.mrb[0].mxu0
        %v810 = vadd.f32 %v429, %v809
        %v811 = vpop.f32.mrb[0].mxu0
        %v812 = vpop.f32.mrb[0].mxu0
        %v813 = vadd.f32 %v429, %v812
        %v814 = vpop.f32.mrb[0].mxu0
        %815 = vmatprep.mubr.bf16.mxu0 0
        %816 = vmatmul.mubr.bf16.gmra.mrb[0].mxu0 %v573
        %v817 = vpop.f32.mrb[0].mxu0
        %v818 = vadd.f32 %v429, %v817
        %v819 = vpop.f32.mrb[0].mxu0
        %v820 = vpop.f32.mrb[0].mxu0
        %v821 = vadd.f32 %v429, %v820
        %v822 = vpop.f32.mrb[0].mxu0
        %823 = vmatprep.mubr.bf16.mxu0 0
        %824 = vmatmul.mubr.bf16.gmra.mrb[0].mxu0 %v574
        %v825 = vpop.f32.mrb[0].mxu0
        %v826 = vadd.f32 %v429, %v825
        %v827 = vpop.f32.mrb[0].mxu0
        %v828 = vpop.f32.mrb[0].mxu0
        %v829 = vadd.f32 %v429, %v828
        %v830 = vpop.f32.mrb[0].mxu0
        %831 = vmatprep.mubr.bf16.mxu0 0
        %832 = vmatmul.mubr.bf16.gmra.mrb[0].mxu0 %v575
        %v833 = vpop.f32.mrb[0].mxu0
        %v834 = vadd.f32 %v429, %v833
        %v835 = vpop.f32.mrb[0].mxu0
        %v836 = vpop.f32.mrb[0].mxu0
        %v837 = vadd.f32 %v429, %v836
        %v838 = vpop.f32.mrb[0].mxu0
        %839 = vmatprep.mubr.bf16.mxu0 0
        %840 = vmatmul.mubr.bf16.gmra.mrb[0].mxu0 %v576
        %v841 = vpop.f32.mrb[0].mxu0
        %v842 = vadd.f32 %v429, %v841
        %v843 = vpop.f32.mrb[0].mxu0
        %v844 = vpop.f32.mrb[0].mxu0
        %v845 = vadd.f32 %v429, %v844
        %v846 = vpop.f32.mrb[0].mxu0
        %847 = vmatprep.mubr.bf16.mxu0 0
        %848 = vmatmul.mubr.bf16.gmra.mrb[0].mxu0 %v577
        %v849 = vpop.f32.mrb[0].mxu0
        %v850 = vadd.f32 %v429, %v849
        %v851 = vpop.f32.mrb[0].mxu0
        %v852 = vpop.f32.mrb[0].mxu0
        %v853 = vadd.f32 %v429, %v852
        %v854 = vpop.f32.mrb[0].mxu0
        %855 = vmatprep.mubr.bf16.mxu0 0
        %856 = vmatmul.mubr.bf16.gmra.mrb[0].mxu0 %v578
        %v857 = vpop.f32.mrb[0].mxu0
        %v858 = vadd.f32 %v429, %v857
        %v859 = vpop.f32.mrb[0].mxu0
        %v860 = vpop.f32.mrb[0].mxu0
        %v861 = vadd.f32 %v429, %v860
        %v862 = vpop.f32.mrb[0].mxu0
        %863 = vmatprep.mubr.bf16.mxu0 0
        %864 = vmatmul.mubr.bf16.gmra.mrb[0].mxu0 %v579
        %v865 = vpop.f32.mrb[0].mxu0
        %v866 = vadd.f32 %v429, %v865
        %v867 = vpop.f32.mrb[0].mxu0
        %v868 = vpop.f32.mrb[0].mxu0
        %v869 = vadd.f32 %v429, %v868
        %v870 = vpop.f32.mrb[0].mxu0
        %871 = vmatprep.mubr.bf16.mxu0 0
        %872 = vmatmul.mubr.bf16.gmra.mrb[0].mxu0 %v580
        %v873 = vpop.f32.mrb[0].mxu0
        %v874 = vadd.f32 %v429, %v873
        %v875 = vpop.f32.mrb[0].mxu0
        %v876 = vpop.f32.mrb[0].mxu0
        %v877 = vadd.f32 %v429, %v876
        %v878 = vpop.f32.mrb[0].mxu0
        %879 = vmatprep.mubr.bf16.mxu0 0
        %880 = vmatmul.mubr.bf16.gmra.mrb[0].mxu0 %v581
        %v881 = vpop.f32.mrb[0].mxu0
        %v882 = vadd.f32 %v429, %v881
        %v883 = vpop.f32.mrb[0].mxu0
        %v884 = vpop.f32.mrb[0].mxu0
        %v885 = vadd.f32 %v429, %v884
        %v886 = vpop.f32.mrb[0].mxu0
        %887 = vmatprep.mubr.bf16.mxu0 0
        %888 = vmatmul.mubr.bf16.gmra.mrb[0].mxu0 %v582
        %v889 = vpop.f32.mrb[0].mxu0
        %v890 = vadd.f32 %v429, %v889
        %v891 = vpop.f32.mrb[0].mxu0
        %v892 = vpop.f32.mrb[0].mxu0
        %v893 = vadd.f32 %v429, %v892
        %v894 = vpop.f32.mrb[0].mxu0
        %895 = vmatprep.mubr.bf16.mxu0 0
        %896 = vmatmul.mubr.bf16.gmra.mrb[0].mxu0 %v583
        %v897 = vpop.f32.mrb[0].mxu0
        %v898 = vadd.f32 %v429, %v897
        %v899 = vpop.f32.mrb[0].mxu0
        %v900 = vpop.f32.mrb[0].mxu0
        %v901 = vadd.f32 %v429, %v900
        %v902 = vpop.f32.mrb[0].mxu0
        %903 = vmatprep.mubr.bf16.mxu0 0
        %904 = vmatmul.mubr.bf16.gmra.mrb[0].mxu0 %v584
        %v905 = vpop.f32.mrb[0].mxu0
        %v906 = vadd.f32 %v429, %v905
        %v907 = vpop.f32.mrb[0].mxu0
        %v908 = vpop.f32.mrb[0].mxu0
        %v909 = vadd.f32 %v429, %v908
        %v910 = vpop.f32.mrb[0].mxu0
        %911 = vmatprep.mubr.bf16.mxu0 0
        %912 = vmatmul.mubr.bf16.gmra.mrb[0].mxu0 %v585
        %v913 = vpop.f32.mrb[0].mxu0
        %v914 = vadd.f32 %v429, %v913
        %v915 = vpop.f32.mrb[0].mxu0
        %v916 = vpop.f32.mrb[0].mxu0
        %v917 = vadd.f32 %v429, %v916
        %v918 = vpop.f32.mrb[0].mxu0
        %919 = vmatprep.mubr.bf16.mxu0 0
        %920 = vmatmul.mubr.bf16.gmra.mrb[0].mxu0 %v586
        %v921 = vpop.f32.mrb[0].mxu0
        %v922 = vadd.f32 %v429, %v921
        %v923 = vpop.f32.mrb[0].mxu0
        %v924 = vpop.f32.mrb[0].mxu0
        %v925 = vadd.f32 %v429, %v924
        %v926 = vpop.f32.mrb[0].mxu0
        %927 = vmatprep.mubr.bf16.mxu0 0
        %928 = vmatmul.mubr.bf16.gmra.mrb[0].mxu0 %v587
        %v929 = vpop.f32.mrb[0].mxu0
        %v930 = vadd.f32 %v429, %v929
        %v931 = vpop.f32.mrb[0].mxu0
        %v932 = vpop.f32.mrb[0].mxu0
        %v933 = vadd.f32 %v429, %v932
        %v934 = vpop.f32.mrb[0].mxu0
        %935 = vmatprep.mubr.bf16.mxu0 0
        %936 = vmatmul.mubr.bf16.gmra.mrb[0].mxu0 %v588
        %v937 = vpop.f32.mrb[0].mxu0
        %v938 = vadd.f32 %v429, %v937
        %v939 = vpop.f32.mrb[0].mxu0
        %v940 = vpop.f32.mrb[0].mxu0
        %v941 = vadd.f32 %v429, %v940
        %v942 = vpop.f32.mrb[0].mxu0
        %943 = vmatprep.mubr.bf16.mxu0 0
        %944 = vmatmul.mubr.bf16.gmra.mrb[0].mxu0 %v589
        %v945 = vpop.f32.mrb[0].mxu0
        %v946 = vadd.f32 %v429, %v945
        %v947 = vpop.f32.mrb[0].mxu0
        %v948 = vpop.f32.mrb[0].mxu0
        %v949 = vadd.f32 %v429, %v948
        %v950 = vpop.f32.mrb[0].mxu0
        %951 = vmatprep.mubr.bf16.mxu0 0
        %952 = vmatmul.mubr.bf16.gmra.mrb[0].mxu0 %v590
        %v953 = vpop.f32.mrb[0].mxu0
        %v954 = vadd.f32 %v429, %v953
        %v955 = vpop.f32.mrb[0].mxu0
        %v956 = vpop.f32.mrb[0].mxu0
        %v957 = vadd.f32 %v429, %v956
        %v958 = vpop.f32.mrb[0].mxu0
        %959 = vdwg.mxu0
        %v960 = vmax.f32 %v706, 0.0
        %v961 = vmax.f32 %v709, 0.0
        %v962 = vmax.f32 %v714, 0.0
        %v963 = vmax.f32 %v717, 0.0
        %v964 = vmax.f32 %v722, 0.0
        %v965 = vmax.f32 %v725, 0.0
        %v966 = vmax.f32 %v730, 0.0
        %v967 = vmax.f32 %v733, 0.0
        %v968 = vmax.f32 %v738, 0.0
        %v969 = vmax.f32 %v741, 0.0
        %v970 = vmax.f32 %v746, 0.0
        %v971 = vmax.f32 %v749, 0.0
        %v972 = vmax.f32 %v754, 0.0
        %v973 = vmax.f32 %v757, 0.0
        %v974 = vmax.f32 %v762, 0.0
        %v975 = vmax.f32 %v765, 0.0
        %v976 = vmax.f32 %v770, 0.0
        %v977 = vmax.f32 %v773, 0.0
        %v978 = vmax.f32 %v778, 0.0
        %v979 = vmax.f32 %v781, 0.0
        %v980 = vmax.f32 %v786, 0.0
        %v981 = vmax.f32 %v789, 0.0
        %v982 = vmax.f32 %v794, 0.0
        %v983 = vmax.f32 %v797, 0.0
        %v984 = vmax.f32 %v802, 0.0
        %v985 = vmax.f32 %v805, 0.0
        %v986 = vmax.f32 %v810, 0.0
        %v987 = vmax.f32 %v813, 0.0
        %v988 = vmax.f32 %v818, 0.0
        %v989 = vmax.f32 %v821, 0.0
        %v990 = vmax.f32 %v826, 0.0
        %v991 = vmax.f32 %v829, 0.0
        %v992 = vmax.f32 %v834, 0.0
        %v993 = vmax.f32 %v837, 0.0
        %v994 = vmax.f32 %v842, 0.0
        %v995 = vmax.f32 %v845, 0.0
        %v996 = vmax.f32 %v850, 0.0
        %v997 = vmax.f32 %v853, 0.0
        %v998 = vmax.f32 %v858, 0.0
        %v999 = vmax.f32 %v861, 0.0
        %v1000 = vmax.f32 %v866, 0.0
        %v1001 = vmax.f32 %v869, 0.0
        %v1002 = vmax.f32 %v874, 0.0
        %v1003 = vmax.f32 %v877, 0.0
        %v1004 = vmax.f32 %v882, 0.0
        %v1005 = vmax.f32 %v885, 0.0
        %v1006 = vmax.f32 %v890, 0.0
        %v1007 = vmax.f32 %v893, 0.0
        %v1008 = vmax.f32 %v898, 0.0
        %v1009 = vmax.f32 %v901, 0.0
        %v1010 = vmax.f32 %v906, 0.0
        %v1011 = vmax.f32 %v909, 0.0
        %v1012 = vmax.f32 %v914, 0.0
        %v1013 = vmax.f32 %v917, 0.0
        %v1014 = vmax.f32 %v922, 0.0
        %v1015 = vmax.f32 %v925, 0.0
        %v1016 = vmax.f32 %v930, 0.0
        %v1017 = vmax.f32 %v933, 0.0
        %v1018 = vmax.f32 %v938, 0.0
        %v1019 = vmax.f32 %v941, 0.0
        %v1020 = vmax.f32 %v946, 0.0
        %v1021 = vmax.f32 %v949, 0.0
        %v1022 = vmax.f32 %v954, 0.0
        %v1023 = vmax.f32 %v957, 0.0
        %v1024 = vpack.c.bf16 %v961, %v960
        %v1025 = vpack.c.bf16 %v963, %v962
        %v1026 = vpack.c.bf16 %v965, %v964
        %v1027 = vpack.c.bf16 %v967, %v966
        %v1028 = vpack.c.bf16 %v969, %v968
        %v1029 = vpack.c.bf16 %v971, %v970
        %v1030 = vpack.c.bf16 %v973, %v972
        %v1031 = vpack.c.bf16 %v975, %v974
        %v1032 = vpack.c.bf16 %v977, %v976
        %v1033 = vpack.c.bf16 %v979, %v978
        %v1034 = vpack.c.bf16 %v981, %v980
        %v1035 = vpack.c.bf16 %v983, %v982
        %v1036 = vpack.c.bf16 %v985, %v984
        %v1037 = vpack.c.bf16 %v987, %v986
        %v1038 = vpack.c.bf16 %v989, %v988
        %v1039 = vpack.c.bf16 %v991, %v990
        %v1040 = vpack.c.bf16 %v993, %v992
        %v1041 = vpack.c.bf16 %v995, %v994
        %v1042 = vpack.c.bf16 %v997, %v996
        %v1043 = vpack.c.bf16 %v999, %v998
        %v1044 = vpack.c.bf16 %v1001, %v1000
        %v1045 = vpack.c.bf16 %v1003, %v1002
        %v1046 = vpack.c.bf16 %v1005, %v1004
        %v1047 = vpack.c.bf16 %v1007, %v1006
        %v1048 = vpack.c.bf16 %v1009, %v1008
        %v1049 = vpack.c.bf16 %v1011, %v1010
        %v1050 = vpack.c.bf16 %v1013, %v1012
        %v1051 = vpack.c.bf16 %v1015, %v1014
        %v1052 = vpack.c.bf16 %v1017, %v1016
        %v1053 = vpack.c.bf16 %v1019, %v1018
        %v1054 = vpack.c.bf16 %v1021, %v1020
        %v1055 = vpack.c.bf16 %v1023, %v1022
        %v1056 = vld [vmem:[#allocation7] sm:$0xf]
        %v1057 = vld [vmem:[#allocation7 + $0x4] sm:$0xf]
        %v1058 = vld [vmem:[#allocation7 + $0x8] sm:$0xf]
        %v1059 = vld [vmem:[#allocation7 + $0xc] sm:$0xf]
        %v1060 = vld [vmem:[#allocation7 + $0x10] sm:$0xf]
        %v1061 = vld [vmem:[#allocation7 + $0x14] sm:$0xf]
        %v1062 = vld [vmem:[#allocation7 + $0x18] sm:$0xf]
        %v1063 = vld [vmem:[#allocation7 + $0x1c] sm:$0xf]
        %v1064 = vld [vmem:[#allocation7 + $0x20] sm:$0xf]
        %v1065 = vld [vmem:[#allocation7 + $0x24] sm:$0xf]
        %v1066 = vld [vmem:[#allocation7 + $0x28] sm:$0xf]
        %v1067 = vld [vmem:[#allocation7 + $0x2c] sm:$0xf]
        %v1068 = vld [vmem:[#allocation7 + $0x30] sm:$0xf]
        %v1069 = vld [vmem:[#allocation7 + $0x34] sm:$0xf]
        %v1070 = vld [vmem:[#allocation7 + $0x38] sm:$0xf]
        %v1071 = vld [vmem:[#allocation7 + $0x3c] sm:$0xf]
        %v1072 = vld [vmem:[%s4] sm:$0x1]
        %v1074 = vlaneseq
        %v1075 = vshrl.u32 %v1074, 7
        %v1076 = vsub.s32 0, %v1075
        %v1077 = vrot.slane %v1072, %v1076
        %v1095 = vunpack.c.l.b16 %v1056
        %v1096 = vunpack.c.l.b16 %v1057
        %v1097 = vunpack.c.l.b16 %v1058
        %v1098 = vunpack.c.l.b16 %v1059
        %v1099 = vunpack.c.l.b16 %v1060
        %v1100 = vunpack.c.l.b16 %v1061
        %v1101 = vunpack.c.l.b16 %v1062
        %v1102 = vunpack.c.l.b16 %v1063
        %v1103 = vunpack.c.l.b16 %v1064
        %v1104 = vunpack.c.l.b16 %v1065
        %v1105 = vunpack.c.l.b16 %v1066
        %v1106 = vunpack.c.l.b16 %v1067
        %v1107 = vunpack.c.l.b16 %v1068
        %v1108 = vunpack.c.l.b16 %v1069
        %v1109 = vunpack.c.l.b16 %v1070
        %v1110 = vunpack.c.l.b16 %v1071
        %v1111 = vpack.c.b16 %v1096, %v1095
        %v1112 = vpack.c.b16 %v1098, %v1097
        %v1113 = vpack.c.b16 %v1100, %v1099
        %v1114 = vpack.c.b16 %v1102, %v1101
        %v1115 = vpack.c.b16 %v1104, %v1103
        %v1116 = vpack.c.b16 %v1106, %v1105
        %v1117 = vpack.c.b16 %v1108, %v1107
        %v1118 = vpack.c.b16 %v1110, %v1109
        %1127 = vmatprep.subr.bf16.mxu0 0
        %1128 = vmatpush1.bf16.msra.mxu0 %v1111
        %1129 = vmatprep.subr.bf16.mxu0 0
        %1130 = vmatpush1.bf16.msra.mxu0 %v1112
        %1131 = vmatprep.subr.bf16.mxu0 0
        %1132 = vmatpush1.bf16.msra.mxu0 %v1113
        %1133 = vmatprep.subr.bf16.mxu0 0
        %1134 = vmatpush1.bf16.msra.mxu0 %v1114
        %1135 = vmatprep.subr.bf16.mxu0 0
        %1136 = vmatpush1.bf16.msra.mxu0 %v1115
        %1137 = vmatprep.subr.bf16.mxu0 0
        %1138 = vmatpush1.bf16.msra.mxu0 %v1116
        %1139 = vmatprep.subr.bf16.mxu0 0
        %1140 = vmatpush1.bf16.msra.mxu0 %v1117
        %1141 = vmatprep.subr.bf16.mxu0 0
        %1142 = vmatpush1.bf16.msra.mxu0 %v1118
        %1143 = vmatprep.subr.bf16.mxu0 0
        %1144 = vmatpush1.bf16.msra.mxu0 0
        %1145 = vmatprep.subr.bf16.mxu0 0
        %1146 = vmatpush1.bf16.msra.mxu0 0
        %1147 = vmatprep.subr.bf16.mxu0 0
        %1148 = vmatpush1.bf16.msra.mxu0 0
        %1149 = vmatprep.subr.bf16.mxu0 0
        %1150 = vmatpush1.bf16.msra.mxu0 0
        %1151 = vmatprep.subr.bf16.mxu0 0
        %1152 = vmatpush1.bf16.msra.mxu0 0
        %1153 = vmatprep.subr.bf16.mxu0 0
        %1154 = vmatpush1.bf16.msra.mxu0 0
        %1155 = vmatprep.subr.bf16.mxu0 0
        %1156 = vmatpush1.bf16.msra.mxu0 0
        %1157 = vmatprep.subr.bf16.mxu0 0
        %1158 = vmatpush1.bf16.msra.mxu0 0
        %1159 = vmatprep.mubr.bf16.mxu0 0
        %1160 = vmatmul.mubr.bf16.gmra.mrb[0].mxu0 %v1024
        %v1161 = vpop.f32.mrb[0].mxu0
        %v1162 = vadd.f32 %v1077, %v1161
        %v1163 = vpop.f32.mrb[0].mxu0
        %v1164 = vpop.f32.mrb[0].mxu0
        %v1165 = vadd.f32 %v1077, %v1164
        %v1166 = vpop.f32.mrb[0].mxu0
        %1167 = vmatprep.mubr.bf16.mxu0 0
        %1168 = vmatmul.mubr.bf16.gmra.mrb[0].mxu0 %v1025
        %v1169 = vpop.f32.mrb[0].mxu0
        %v1170 = vadd.f32 %v1077, %v1169
        %v1171 = vpop.f32.mrb[0].mxu0
        %v1172 = vpop.f32.mrb[0].mxu0
        %v1173 = vadd.f32 %v1077, %v1172
        %v1174 = vpop.f32.mrb[0].mxu0
        %1175 = vmatprep.mubr.bf16.mxu0 0
        %1176 = vmatmul.mubr.bf16.gmra.mrb[0].mxu0 %v1026
        %v1177 = vpop.f32.mrb[0].mxu0
        %v1178 = vadd.f32 %v1077, %v1177
        %v1179 = vpop.f32.mrb[0].mxu0
        %v1180 = vpop.f32.mrb[0].mxu0
        %v1181 = vadd.f32 %v1077, %v1180
        %v1182 = vpop.f32.mrb[0].mxu0
        %1183 = vmatprep.mubr.bf16.mxu0 0
        %1184 = vmatmul.mubr.bf16.gmra.mrb[0].mxu0 %v1027
        %v1185 = vpop.f32.mrb[0].mxu0
        %v1186 = vadd.f32 %v1077, %v1185
        %v1187 = vpop.f32.mrb[0].mxu0
        %v1188 = vpop.f32.mrb[0].mxu0
        %v1189 = vadd.f32 %v1077, %v1188
        %v1190 = vpop.f32.mrb[0].mxu0
        %1191 = vmatprep.mubr.bf16.mxu0 0
        %1192 = vmatmul.mubr.bf16.gmra.mrb[0].mxu0 %v1028
        %v1193 = vpop.f32.mrb[0].mxu0
        %v1194 = vadd.f32 %v1077, %v1193
        %v1195 = vpop.f32.mrb[0].mxu0
        %v1196 = vpop.f32.mrb[0].mxu0
        %v1197 = vadd.f32 %v1077, %v1196
        %v1198 = vpop.f32.mrb[0].mxu0
        %1199 = vmatprep.mubr.bf16.mxu0 0
        %1200 = vmatmul.mubr.bf16.gmra.mrb[0].mxu0 %v1029
        %v1201 = vpop.f32.mrb[0].mxu0
        %v1202 = vadd.f32 %v1077, %v1201
        %v1203 = vpop.f32.mrb[0].mxu0
        %v1204 = vpop.f32.mrb[0].mxu0
        %v1205 = vadd.f32 %v1077, %v1204
        %v1206 = vpop.f32.mrb[0].mxu0
        %1207 = vmatprep.mubr.bf16.mxu0 0
        %1208 = vmatmul.mubr.bf16.gmra.mrb[0].mxu0 %v1030
        %v1209 = vpop.f32.mrb[0].mxu0
        %v1210 = vadd.f32 %v1077, %v1209
        %v1211 = vpop.f32.mrb[0].mxu0
        %v1212 = vpop.f32.mrb[0].mxu0
        %v1213 = vadd.f32 %v1077, %v1212
        %v1214 = vpop.f32.mrb[0].mxu0
        %1215 = vmatprep.mubr.bf16.mxu0 0
        %1216 = vmatmul.mubr.bf16.gmra.mrb[0].mxu0 %v1031
        %v1217 = vpop.f32.mrb[0].mxu0
        %v1218 = vadd.f32 %v1077, %v1217
        %v1219 = vpop.f32.mrb[0].mxu0
        %v1220 = vpop.f32.mrb[0].mxu0
        %v1221 = vadd.f32 %v1077, %v1220
        %v1222 = vpop.f32.mrb[0].mxu0
        %1223 = vmatprep.mubr.bf16.mxu0 0
        %1224 = vmatmul.mubr.bf16.gmra.mrb[0].mxu0 %v1032
        %v1225 = vpop.f32.mrb[0].mxu0
        %v1226 = vadd.f32 %v1077, %v1225
        %v1227 = vpop.f32.mrb[0].mxu0
        %v1228 = vpop.f32.mrb[0].mxu0
        %v1229 = vadd.f32 %v1077, %v1228
        %v1230 = vpop.f32.mrb[0].mxu0
        %1231 = vmatprep.mubr.bf16.mxu0 0
        %1232 = vmatmul.mubr.bf16.gmra.mrb[0].mxu0 %v1033
        %v1233 = vpop.f32.mrb[0].mxu0
        %v1234 = vadd.f32 %v1077, %v1233
        %v1235 = vpop.f32.mrb[0].mxu0
        %v1236 = vpop.f32.mrb[0].mxu0
        %v1237 = vadd.f32 %v1077, %v1236
        %v1238 = vpop.f32.mrb[0].mxu0
        %1239 = vmatprep.mubr.bf16.mxu0 0
        %1240 = vmatmul.mubr.bf16.gmra.mrb[0].mxu0 %v1034
        %v1241 = vpop.f32.mrb[0].mxu0
        %v1242 = vadd.f32 %v1077, %v1241
        %v1243 = vpop.f32.mrb[0].mxu0
        %v1244 = vpop.f32.mrb[0].mxu0
        %v1245 = vadd.f32 %v1077, %v1244
        %v1246 = vpop.f32.mrb[0].mxu0
        %1247 = vmatprep.mubr.bf16.mxu0 0
        %1248 = vmatmul.mubr.bf16.gmra.mrb[0].mxu0 %v1035
        %v1249 = vpop.f32.mrb[0].mxu0
        %v1250 = vadd.f32 %v1077, %v1249
        %v1251 = vpop.f32.mrb[0].mxu0
        %v1252 = vpop.f32.mrb[0].mxu0
        %v1253 = vadd.f32 %v1077, %v1252
        %v1254 = vpop.f32.mrb[0].mxu0
        %1255 = vmatprep.mubr.bf16.mxu0 0
        %1256 = vmatmul.mubr.bf16.gmra.mrb[0].mxu0 %v1036
        %v1257 = vpop.f32.mrb[0].mxu0
        %v1258 = vadd.f32 %v1077, %v1257
        %v1259 = vpop.f32.mrb[0].mxu0
        %v1260 = vpop.f32.mrb[0].mxu0
        %v1261 = vadd.f32 %v1077, %v1260
        %v1262 = vpop.f32.mrb[0].mxu0
        %1263 = vmatprep.mubr.bf16.mxu0 0
        %1264 = vmatmul.mubr.bf16.gmra.mrb[0].mxu0 %v1037
        %v1265 = vpop.f32.mrb[0].mxu0
        %v1266 = vadd.f32 %v1077, %v1265
        %v1267 = vpop.f32.mrb[0].mxu0
        %v1268 = vpop.f32.mrb[0].mxu0
        %v1269 = vadd.f32 %v1077, %v1268
        %v1270 = vpop.f32.mrb[0].mxu0
        %1271 = vmatprep.mubr.bf16.mxu0 0
        %1272 = vmatmul.mubr.bf16.gmra.mrb[0].mxu0 %v1038
        %v1273 = vpop.f32.mrb[0].mxu0
        %v1274 = vadd.f32 %v1077, %v1273
        %v1275 = vpop.f32.mrb[0].mxu0
        %v1276 = vpop.f32.mrb[0].mxu0
        %v1277 = vadd.f32 %v1077, %v1276
        %v1278 = vpop.f32.mrb[0].mxu0
        %1279 = vmatprep.mubr.bf16.mxu0 0
        %1280 = vmatmul.mubr.bf16.gmra.mrb[0].mxu0 %v1039
        %v1281 = vpop.f32.mrb[0].mxu0
        %v1282 = vadd.f32 %v1077, %v1281
        %v1283 = vpop.f32.mrb[0].mxu0
        %v1284 = vpop.f32.mrb[0].mxu0
        %v1285 = vadd.f32 %v1077, %v1284
        %v1286 = vpop.f32.mrb[0].mxu0
        %1287 = vmatprep.mubr.bf16.mxu0 0
        %1288 = vmatmul.mubr.bf16.gmra.mrb[0].mxu0 %v1040
        %v1289 = vpop.f32.mrb[0].mxu0
        %v1290 = vadd.f32 %v1077, %v1289
        %v1291 = vpop.f32.mrb[0].mxu0
        %v1292 = vpop.f32.mrb[0].mxu0
        %v1293 = vadd.f32 %v1077, %v1292
        %v1294 = vpop.f32.mrb[0].mxu0
        %1295 = vmatprep.mubr.bf16.mxu0 0
        %1296 = vmatmul.mubr.bf16.gmra.mrb[0].mxu0 %v1041
        %v1297 = vpop.f32.mrb[0].mxu0
        %v1298 = vadd.f32 %v1077, %v1297
        %v1299 = vpop.f32.mrb[0].mxu0
        %v1300 = vpop.f32.mrb[0].mxu0
        %v1301 = vadd.f32 %v1077, %v1300
        %v1302 = vpop.f32.mrb[0].mxu0
        %1303 = vmatprep.mubr.bf16.mxu0 0
        %1304 = vmatmul.mubr.bf16.gmra.mrb[0].mxu0 %v1042
        %v1305 = vpop.f32.mrb[0].mxu0
        %v1306 = vadd.f32 %v1077, %v1305
        %v1307 = vpop.f32.mrb[0].mxu0
        %v1308 = vpop.f32.mrb[0].mxu0
        %v1309 = vadd.f32 %v1077, %v1308
        %v1310 = vpop.f32.mrb[0].mxu0
        %1311 = vmatprep.mubr.bf16.mxu0 0
        %1312 = vmatmul.mubr.bf16.gmra.mrb[0].mxu0 %v1043
        %v1313 = vpop.f32.mrb[0].mxu0
        %v1314 = vadd.f32 %v1077, %v1313
        %v1315 = vpop.f32.mrb[0].mxu0
        %v1316 = vpop.f32.mrb[0].mxu0
        %v1317 = vadd.f32 %v1077, %v1316
        %v1318 = vpop.f32.mrb[0].mxu0
        %1319 = vmatprep.mubr.bf16.mxu0 0
        %1320 = vmatmul.mubr.bf16.gmra.mrb[0].mxu0 %v1044
        %v1321 = vpop.f32.mrb[0].mxu0
        %v1322 = vadd.f32 %v1077, %v1321
        %v1323 = vpop.f32.mrb[0].mxu0
        %v1324 = vpop.f32.mrb[0].mxu0
        %v1325 = vadd.f32 %v1077, %v1324
        %v1326 = vpop.f32.mrb[0].mxu0
        %1327 = vmatprep.mubr.bf16.mxu0 0
        %1328 = vmatmul.mubr.bf16.gmra.mrb[0].mxu0 %v1045
        %v1329 = vpop.f32.mrb[0].mxu0
        %v1330 = vadd.f32 %v1077, %v1329
        %v1331 = vpop.f32.mrb[0].mxu0
        %v1332 = vpop.f32.mrb[0].mxu0
        %v1333 = vadd.f32 %v1077, %v1332
        %v1334 = vpop.f32.mrb[0].mxu0
        %1335 = vmatprep.mubr.bf16.mxu0 0
        %1336 = vmatmul.mubr.bf16.gmra.mrb[0].mxu0 %v1046
        %v1337 = vpop.f32.mrb[0].mxu0
        %v1338 = vadd.f32 %v1077, %v1337
        %v1339 = vpop.f32.mrb[0].mxu0
        %v1340 = vpop.f32.mrb[0].mxu0
        %v1341 = vadd.f32 %v1077, %v1340
        %v1342 = vpop.f32.mrb[0].mxu0
        %1343 = vmatprep.mubr.bf16.mxu0 0
        %1344 = vmatmul.mubr.bf16.gmra.mrb[0].mxu0 %v1047
        %v1345 = vpop.f32.mrb[0].mxu0
        %v1346 = vadd.f32 %v1077, %v1345
        %v1347 = vpop.f32.mrb[0].mxu0
        %v1348 = vpop.f32.mrb[0].mxu0
        %v1349 = vadd.f32 %v1077, %v1348
        %v1350 = vpop.f32.mrb[0].mxu0
        %1351 = vmatprep.mubr.bf16.mxu0 0
        %1352 = vmatmul.mubr.bf16.gmra.mrb[0].mxu0 %v1048
        %v1353 = vpop.f32.mrb[0].mxu0
        %v1354 = vadd.f32 %v1077, %v1353
        %v1355 = vpop.f32.mrb[0].mxu0
        %v1356 = vpop.f32.mrb[0].mxu0
        %v1357 = vadd.f32 %v1077, %v1356
        %v1358 = vpop.f32.mrb[0].mxu0
        %1359 = vmatprep.mubr.bf16.mxu0 0
        %1360 = vmatmul.mubr.bf16.gmra.mrb[0].mxu0 %v1049
        %v1361 = vpop.f32.mrb[0].mxu0
        %v1362 = vadd.f32 %v1077, %v1361
        %v1363 = vpop.f32.mrb[0].mxu0
        %v1364 = vpop.f32.mrb[0].mxu0
        %v1365 = vadd.f32 %v1077, %v1364
        %v1366 = vpop.f32.mrb[0].mxu0
        %1367 = vmatprep.mubr.bf16.mxu0 0
        %1368 = vmatmul.mubr.bf16.gmra.mrb[0].mxu0 %v1050
        %v1369 = vpop.f32.mrb[0].mxu0
        %v1370 = vadd.f32 %v1077, %v1369
        %v1371 = vpop.f32.mrb[0].mxu0
        %v1372 = vpop.f32.mrb[0].mxu0
        %v1373 = vadd.f32 %v1077, %v1372
        %v1374 = vpop.f32.mrb[0].mxu0
        %1375 = vmatprep.mubr.bf16.mxu0 0
        %1376 = vmatmul.mubr.bf16.gmra.mrb[0].mxu0 %v1051
        %v1377 = vpop.f32.mrb[0].mxu0
        %v1378 = vadd.f32 %v1077, %v1377
        %v1379 = vpop.f32.mrb[0].mxu0
        %v1380 = vpop.f32.mrb[0].mxu0
        %v1381 = vadd.f32 %v1077, %v1380
        %v1382 = vpop.f32.mrb[0].mxu0
        %1383 = vmatprep.mubr.bf16.mxu0 0
        %1384 = vmatmul.mubr.bf16.gmra.mrb[0].mxu0 %v1052
        %v1385 = vpop.f32.mrb[0].mxu0
        %v1386 = vadd.f32 %v1077, %v1385
        %v1387 = vpop.f32.mrb[0].mxu0
        %v1388 = vpop.f32.mrb[0].mxu0
        %v1389 = vadd.f32 %v1077, %v1388
        %v1390 = vpop.f32.mrb[0].mxu0
        %1391 = vmatprep.mubr.bf16.mxu0 0
        %1392 = vmatmul.mubr.bf16.gmra.mrb[0].mxu0 %v1053
        %v1393 = vpop.f32.mrb[0].mxu0
        %v1394 = vadd.f32 %v1077, %v1393
        %v1395 = vpop.f32.mrb[0].mxu0
        %v1396 = vpop.f32.mrb[0].mxu0
        %v1397 = vadd.f32 %v1077, %v1396
        %v1398 = vpop.f32.mrb[0].mxu0
        %1399 = vmatprep.mubr.bf16.mxu0 0
        %1400 = vmatmul.mubr.bf16.gmra.mrb[0].mxu0 %v1054
        %v1401 = vpop.f32.mrb[0].mxu0
        %v1402 = vadd.f32 %v1077, %v1401
        %v1403 = vpop.f32.mrb[0].mxu0
        %v1404 = vpop.f32.mrb[0].mxu0
        %v1405 = vadd.f32 %v1077, %v1404
        %v1406 = vpop.f32.mrb[0].mxu0
        %1407 = vmatprep.mubr.bf16.mxu0 0
        %1408 = vmatmul.mubr.bf16.gmra.mrb[0].mxu0 %v1055
        %v1409 = vpop.f32.mrb[0].mxu0
        %v1410 = vadd.f32 %v1077, %v1409
        %v1411 = vpop.f32.mrb[0].mxu0
        %v1412 = vpop.f32.mrb[0].mxu0
        %v1413 = vadd.f32 %v1077, %v1412
        %v1414 = vpop.f32.mrb[0].mxu0
        %1415 = vdwg.mxu0
        %v1416 = vmax.f32 %v1162, 0.0
        %v1417 = vmax.f32 %v1165, 0.0
        %v1418 = vmax.f32 %v1170, 0.0
        %v1419 = vmax.f32 %v1173, 0.0
        %v1420 = vmax.f32 %v1178, 0.0
        %v1421 = vmax.f32 %v1181, 0.0
        %v1422 = vmax.f32 %v1186, 0.0
        %v1423 = vmax.f32 %v1189, 0.0
        %v1424 = vmax.f32 %v1194, 0.0
        %v1425 = vmax.f32 %v1197, 0.0
        %v1426 = vmax.f32 %v1202, 0.0
        %v1427 = vmax.f32 %v1205, 0.0
        %v1428 = vmax.f32 %v1210, 0.0
        %v1429 = vmax.f32 %v1213, 0.0
        %v1430 = vmax.f32 %v1218, 0.0
        %v1431 = vmax.f32 %v1221, 0.0
        %v1432 = vmax.f32 %v1226, 0.0
        %v1433 = vmax.f32 %v1229, 0.0
        %v1434 = vmax.f32 %v1234, 0.0
        %v1435 = vmax.f32 %v1237, 0.0
        %v1436 = vmax.f32 %v1242, 0.0
        %v1437 = vmax.f32 %v1245, 0.0
        %v1438 = vmax.f32 %v1250, 0.0
        %v1439 = vmax.f32 %v1253, 0.0
        %v1440 = vmax.f32 %v1258, 0.0
        %v1441 = vmax.f32 %v1261, 0.0
        %v1442 = vmax.f32 %v1266, 0.0
        %v1443 = vmax.f32 %v1269, 0.0
        %v1444 = vmax.f32 %v1274, 0.0
        %v1445 = vmax.f32 %v1277, 0.0
        %v1446 = vmax.f32 %v1282, 0.0
        %v1447 = vmax.f32 %v1285, 0.0
        %v1448 = vmax.f32 %v1290, 0.0
        %v1449 = vmax.f32 %v1293, 0.0
        %v1450 = vmax.f32 %v1298, 0.0
        %v1451 = vmax.f32 %v1301, 0.0
        %v1452 = vmax.f32 %v1306, 0.0
        %v1453 = vmax.f32 %v1309, 0.0
        %v1454 = vmax.f32 %v1314, 0.0
        %v1455 = vmax.f32 %v1317, 0.0
        %v1456 = vmax.f32 %v1322, 0.0
        %v1457 = vmax.f32 %v1325, 0.0
        %v1458 = vmax.f32 %v1330, 0.0
        %v1459 = vmax.f32 %v1333, 0.0
        %v1460 = vmax.f32 %v1338, 0.0
        %v1461 = vmax.f32 %v1341, 0.0
        %v1462 = vmax.f32 %v1346, 0.0
        %v1463 = vmax.f32 %v1349, 0.0
        %v1464 = vmax.f32 %v1354, 0.0
        %v1465 = vmax.f32 %v1357, 0.0
        %v1466 = vmax.f32 %v1362, 0.0
        %v1467 = vmax.f32 %v1365, 0.0
        %v1468 = vmax.f32 %v1370, 0.0
        %v1469 = vmax.f32 %v1373, 0.0
        %v1470 = vmax.f32 %v1378, 0.0
        %v1471 = vmax.f32 %v1381, 0.0
        %v1472 = vmax.f32 %v1386, 0.0
        %v1473 = vmax.f32 %v1389, 0.0
        %v1474 = vmax.f32 %v1394, 0.0
        %v1475 = vmax.f32 %v1397, 0.0
        %v1476 = vmax.f32 %v1402, 0.0
        %v1477 = vmax.f32 %v1405, 0.0
        %v1478 = vmax.f32 %v1410, 0.0
        %v1479 = vmax.f32 %v1413, 0.0
        %v1480 = vpack.c.bf16 %v1417, %v1416
        %v1481 = vpack.c.bf16 %v1419, %v1418
        %v1482 = vpack.c.bf16 %v1421, %v1420
        %v1483 = vpack.c.bf16 %v1423, %v1422
        %v1484 = vpack.c.bf16 %v1425, %v1424
        %v1485 = vpack.c.bf16 %v1427, %v1426
        %v1486 = vpack.c.bf16 %v1429, %v1428
        %v1487 = vpack.c.bf16 %v1431, %v1430
        %v1488 = vpack.c.bf16 %v1433, %v1432
        %v1489 = vpack.c.bf16 %v1435, %v1434
        %v1490 = vpack.c.bf16 %v1437, %v1436
        %v1491 = vpack.c.bf16 %v1439, %v1438
        %v1492 = vpack.c.bf16 %v1441, %v1440
        %v1493 = vpack.c.bf16 %v1443, %v1442
        %v1494 = vpack.c.bf16 %v1445, %v1444
        %v1495 = vpack.c.bf16 %v1447, %v1446
        %v1496 = vpack.c.bf16 %v1449, %v1448
        %v1497 = vpack.c.bf16 %v1451, %v1450
        %v1498 = vpack.c.bf16 %v1453, %v1452
        %v1499 = vpack.c.bf16 %v1455, %v1454
        %v1500 = vpack.c.bf16 %v1457, %v1456
        %v1501 = vpack.c.bf16 %v1459, %v1458
        %v1502 = vpack.c.bf16 %v1461, %v1460
        %v1503 = vpack.c.bf16 %v1463, %v1462
        %v1504 = vpack.c.bf16 %v1465, %v1464
        %v1505 = vpack.c.bf16 %v1467, %v1466
        %v1506 = vpack.c.bf16 %v1469, %v1468
        %v1507 = vpack.c.bf16 %v1471, %v1470
        %v1508 = vpack.c.bf16 %v1473, %v1472
        %v1509 = vpack.c.bf16 %v1475, %v1474
        %v1510 = vpack.c.bf16 %v1477, %v1476
        %v1511 = vpack.c.bf16 %v1479, %v1478
        %v1512 = vld [vmem:[#allocation8] sm:$0xf]
        %v1513 = vld [vmem:[#allocation8 + $0x4] sm:$0xf]
        %v1514 = vld [vmem:[#allocation8 + $0x8] sm:$0xf]
        %v1515 = vld [vmem:[#allocation8 + $0xc] sm:$0xf]
        %v1516 = vld [vmem:[#allocation8 + $0x10] sm:$0xf]
        %v1517 = vld [vmem:[#allocation8 + $0x14] sm:$0xf]
        %v1518 = vld [vmem:[#allocation8 + $0x18] sm:$0xf]
        %v1519 = vld [vmem:[#allocation8 + $0x1c] sm:$0xf]
        %v1520 = vld [vmem:[#allocation8 + $0x20] sm:$0xf]
        %v1521 = vld [vmem:[#allocation8 + $0x24] sm:$0xf]
        %v1522 = vld [vmem:[#allocation8 + $0x28] sm:$0xf]
        %v1523 = vld [vmem:[#allocation8 + $0x2c] sm:$0xf]
        %v1524 = vld [vmem:[#allocation8 + $0x30] sm:$0xf]
        %v1525 = vld [vmem:[#allocation8 + $0x34] sm:$0xf]
        %v1526 = vld [vmem:[#allocation8 + $0x38] sm:$0xf]
        %v1527 = vld [vmem:[#allocation8 + $0x3c] sm:$0xf]
        %v1528 = vld [vmem:[%s6] sm:$0x1]
        %v1530 = vlaneseq
        %v1531 = vshrl.u32 %v1530, 7
        %v1532 = vsub.s32 0, %v1531
        %v1533 = vrot.slane %v1528, %v1532
        %v1551 = vunpack.c.l.b16 %v1512
        %v1552 = vunpack.c.l.b16 %v1513
        %v1553 = vunpack.c.l.b16 %v1514
        %v1554 = vunpack.c.l.b16 %v1515
        %v1555 = vunpack.c.l.b16 %v1516
        %v1556 = vunpack.c.l.b16 %v1517
        %v1557 = vunpack.c.l.b16 %v1518
        %v1558 = vunpack.c.l.b16 %v1519
        %v1559 = vunpack.c.l.b16 %v1520
        %v1560 = vunpack.c.l.b16 %v1521
        %v1561 = vunpack.c.l.b16 %v1522
        %v1562 = vunpack.c.l.b16 %v1523
        %v1563 = vunpack.c.l.b16 %v1524
        %v1564 = vunpack.c.l.b16 %v1525
        %v1565 = vunpack.c.l.b16 %v1526
        %v1566 = vunpack.c.l.b16 %v1527
        %v1567 = vpack.c.b16 %v1552, %v1551
        %v1568 = vpack.c.b16 %v1554, %v1553
        %v1569 = vpack.c.b16 %v1556, %v1555
        %v1570 = vpack.c.b16 %v1558, %v1557
        %v1571 = vpack.c.b16 %v1560, %v1559
        %v1572 = vpack.c.b16 %v1562, %v1561
        %v1573 = vpack.c.b16 %v1564, %v1563
        %v1574 = vpack.c.b16 %v1566, %v1565
        %1583 = vmatprep.subr.bf16.mxu0 0
        %1584 = vmatpush1.bf16.msra.mxu0 %v1567
        %1585 = vmatprep.subr.bf16.mxu0 0
        %1586 = vmatpush1.bf16.msra.mxu0 %v1568
        %1587 = vmatprep.subr.bf16.mxu0 0
        %1588 = vmatpush1.bf16.msra.mxu0 %v1569
        %1589 = vmatprep.subr.bf16.mxu0 0
        %1590 = vmatpush1.bf16.msra.mxu0 %v1570
        %1591 = vmatprep.subr.bf16.mxu0 0
        %1592 = vmatpush1.bf16.msra.mxu0 %v1571
        %1593 = vmatprep.subr.bf16.mxu0 0
        %1594 = vmatpush1.bf16.msra.mxu0 %v1572
        %1595 = vmatprep.subr.bf16.mxu0 0
        %1596 = vmatpush1.bf16.msra.mxu0 %v1573
        %1597 = vmatprep.subr.bf16.mxu0 0
        %1598 = vmatpush1.bf16.msra.mxu0 %v1574
        %1599 = vmatprep.subr.bf16.mxu0 0
        %1600 = vmatpush1.bf16.msra.mxu0 0
        %1601 = vmatprep.subr.bf16.mxu0 0
        %1602 = vmatpush1.bf16.msra.mxu0 0
        %1603 = vmatprep.subr.bf16.mxu0 0
        %1604 = vmatpush1.bf16.msra.mxu0 0
        %1605 = vmatprep.subr.bf16.mxu0 0
        %1606 = vmatpush1.bf16.msra.mxu0 0
        %1607 = vmatprep.subr.bf16.mxu0 0
        %1608 = vmatpush1.bf16.msra.mxu0 0
        %1609 = vmatprep.subr.bf16.mxu0 0
        %1610 = vmatpush1.bf16.msra.mxu0 0
        %1611 = vmatprep.subr.bf16.mxu0 0
        %1612 = vmatpush1.bf16.msra.mxu0 0
        %1613 = vmatprep.subr.bf16.mxu0 0
        %1614 = vmatpush1.bf16.msra.mxu0 0
        %1615 = vmatprep.mubr.bf16.mxu0 0
        %1616 = vmatmul.mubr.bf16.gmra.mrb[0].mxu0 %v1480
        %v1617 = vpop.f32.mrb[0].mxu0
        %v1618 = vadd.f32 %v1533, %v1617
        %v1619 = vpop.f32.mrb[0].mxu0
        %v1620 = vpop.f32.mrb[0].mxu0
        %v1621 = vadd.f32 %v1533, %v1620
        %v1622 = vpop.f32.mrb[0].mxu0
        %1623 = vmatprep.mubr.bf16.mxu0 0
        %1624 = vmatmul.mubr.bf16.gmra.mrb[0].mxu0 %v1481
        %v1625 = vpop.f32.mrb[0].mxu0
        %v1626 = vadd.f32 %v1533, %v1625
        %v1627 = vpop.f32.mrb[0].mxu0
        %v1628 = vpop.f32.mrb[0].mxu0
        %v1629 = vadd.f32 %v1533, %v1628
        %v1630 = vpop.f32.mrb[0].mxu0
        %1631 = vmatprep.mubr.bf16.mxu0 0
        %1632 = vmatmul.mubr.bf16.gmra.mrb[0].mxu0 %v1482
        %v1633 = vpop.f32.mrb[0].mxu0
        %v1634 = vadd.f32 %v1533, %v1633
        %v1635 = vpop.f32.mrb[0].mxu0
        %v1636 = vpop.f32.mrb[0].mxu0
        %v1637 = vadd.f32 %v1533, %v1636
        %v1638 = vpop.f32.mrb[0].mxu0
        %1639 = vmatprep.mubr.bf16.mxu0 0
        %1640 = vmatmul.mubr.bf16.gmra.mrb[0].mxu0 %v1483
        %v1641 = vpop.f32.mrb[0].mxu0
        %v1642 = vadd.f32 %v1533, %v1641
        %v1643 = vpop.f32.mrb[0].mxu0
        %v1644 = vpop.f32.mrb[0].mxu0
        %v1645 = vadd.f32 %v1533, %v1644
        %v1646 = vpop.f32.mrb[0].mxu0
        %1647 = vmatprep.mubr.bf16.mxu0 0
        %1648 = vmatmul.mubr.bf16.gmra.mrb[0].mxu0 %v1484
        %v1649 = vpop.f32.mrb[0].mxu0
        %v1650 = vadd.f32 %v1533, %v1649
        %v1651 = vpop.f32.mrb[0].mxu0
        %v1652 = vpop.f32.mrb[0].mxu0
        %v1653 = vadd.f32 %v1533, %v1652
        %v1654 = vpop.f32.mrb[0].mxu0
        %1655 = vmatprep.mubr.bf16.mxu0 0
        %1656 = vmatmul.mubr.bf16.gmra.mrb[0].mxu0 %v1485
        %v1657 = vpop.f32.mrb[0].mxu0
        %v1658 = vadd.f32 %v1533, %v1657
        %v1659 = vpop.f32.mrb[0].mxu0
        %v1660 = vpop.f32.mrb[0].mxu0
        %v1661 = vadd.f32 %v1533, %v1660
        %v1662 = vpop.f32.mrb[0].mxu0
        %1663 = vmatprep.mubr.bf16.mxu0 0
        %1664 = vmatmul.mubr.bf16.gmra.mrb[0].mxu0 %v1486
        %v1665 = vpop.f32.mrb[0].mxu0
        %v1666 = vadd.f32 %v1533, %v1665
        %v1667 = vpop.f32.mrb[0].mxu0
        %v1668 = vpop.f32.mrb[0].mxu0
        %v1669 = vadd.f32 %v1533, %v1668
        %v1670 = vpop.f32.mrb[0].mxu0
        %1671 = vmatprep.mubr.bf16.mxu0 0
        %1672 = vmatmul.mubr.bf16.gmra.mrb[0].mxu0 %v1487
        %v1673 = vpop.f32.mrb[0].mxu0
        %v1674 = vadd.f32 %v1533, %v1673
        %v1675 = vpop.f32.mrb[0].mxu0
        %v1676 = vpop.f32.mrb[0].mxu0
        %v1677 = vadd.f32 %v1533, %v1676
        %v1678 = vpop.f32.mrb[0].mxu0
        %1679 = vmatprep.mubr.bf16.mxu0 0
        %1680 = vmatmul.mubr.bf16.gmra.mrb[0].mxu0 %v1488
        %v1681 = vpop.f32.mrb[0].mxu0
        %v1682 = vadd.f32 %v1533, %v1681
        %v1683 = vpop.f32.mrb[0].mxu0
        %v1684 = vpop.f32.mrb[0].mxu0
        %v1685 = vadd.f32 %v1533, %v1684
        %v1686 = vpop.f32.mrb[0].mxu0
        %1687 = vmatprep.mubr.bf16.mxu0 0
        %1688 = vmatmul.mubr.bf16.gmra.mrb[0].mxu0 %v1489
        %v1689 = vpop.f32.mrb[0].mxu0
        %v1690 = vadd.f32 %v1533, %v1689
        %v1691 = vpop.f32.mrb[0].mxu0
        %v1692 = vpop.f32.mrb[0].mxu0
        %v1693 = vadd.f32 %v1533, %v1692
        %v1694 = vpop.f32.mrb[0].mxu0
        %1695 = vmatprep.mubr.bf16.mxu0 0
        %1696 = vmatmul.mubr.bf16.gmra.mrb[0].mxu0 %v1490
        %v1697 = vpop.f32.mrb[0].mxu0
        %v1698 = vadd.f32 %v1533, %v1697
        %v1699 = vpop.f32.mrb[0].mxu0
        %v1700 = vpop.f32.mrb[0].mxu0
        %v1701 = vadd.f32 %v1533, %v1700
        %v1702 = vpop.f32.mrb[0].mxu0
        %1703 = vmatprep.mubr.bf16.mxu0 0
        %1704 = vmatmul.mubr.bf16.gmra.mrb[0].mxu0 %v1491
        %v1705 = vpop.f32.mrb[0].mxu0
        %v1706 = vadd.f32 %v1533, %v1705
        %v1707 = vpop.f32.mrb[0].mxu0
        %v1708 = vpop.f32.mrb[0].mxu0
        %v1709 = vadd.f32 %v1533, %v1708
        %v1710 = vpop.f32.mrb[0].mxu0
        %1711 = vmatprep.mubr.bf16.mxu0 0
        %1712 = vmatmul.mubr.bf16.gmra.mrb[0].mxu0 %v1492
        %v1713 = vpop.f32.mrb[0].mxu0
        %v1714 = vadd.f32 %v1533, %v1713
        %v1715 = vpop.f32.mrb[0].mxu0
        %v1716 = vpop.f32.mrb[0].mxu0
        %v1717 = vadd.f32 %v1533, %v1716
        %v1718 = vpop.f32.mrb[0].mxu0
        %1719 = vmatprep.mubr.bf16.mxu0 0
        %1720 = vmatmul.mubr.bf16.gmra.mrb[0].mxu0 %v1493
        %v1721 = vpop.f32.mrb[0].mxu0
        %v1722 = vadd.f32 %v1533, %v1721
        %v1723 = vpop.f32.mrb[0].mxu0
        %v1724 = vpop.f32.mrb[0].mxu0
        %v1725 = vadd.f32 %v1533, %v1724
        %v1726 = vpop.f32.mrb[0].mxu0
        %1727 = vmatprep.mubr.bf16.mxu0 0
        %1728 = vmatmul.mubr.bf16.gmra.mrb[0].mxu0 %v1494
        %v1729 = vpop.f32.mrb[0].mxu0
        %v1730 = vadd.f32 %v1533, %v1729
        %v1731 = vpop.f32.mrb[0].mxu0
        %v1732 = vpop.f32.mrb[0].mxu0
        %v1733 = vadd.f32 %v1533, %v1732
        %v1734 = vpop.f32.mrb[0].mxu0
        %1735 = vmatprep.mubr.bf16.mxu0 0
        %1736 = vmatmul.mubr.bf16.gmra.mrb[0].mxu0 %v1495
        %v1737 = vpop.f32.mrb[0].mxu0
        %v1738 = vadd.f32 %v1533, %v1737
        %v1739 = vpop.f32.mrb[0].mxu0
        %v1740 = vpop.f32.mrb[0].mxu0
        %v1741 = vadd.f32 %v1533, %v1740
        %v1742 = vpop.f32.mrb[0].mxu0
        %1743 = vmatprep.mubr.bf16.mxu0 0
        %1744 = vmatmul.mubr.bf16.gmra.mrb[0].mxu0 %v1496
        %v1745 = vpop.f32.mrb[0].mxu0
        %v1746 = vadd.f32 %v1533, %v1745
        %v1747 = vpop.f32.mrb[0].mxu0
        %v1748 = vpop.f32.mrb[0].mxu0
        %v1749 = vadd.f32 %v1533, %v1748
        %v1750 = vpop.f32.mrb[0].mxu0
        %1751 = vmatprep.mubr.bf16.mxu0 0
        %1752 = vmatmul.mubr.bf16.gmra.mrb[0].mxu0 %v1497
        %v1753 = vpop.f32.mrb[0].mxu0
        %v1754 = vadd.f32 %v1533, %v1753
        %v1755 = vpop.f32.mrb[0].mxu0
        %v1756 = vpop.f32.mrb[0].mxu0
        %v1757 = vadd.f32 %v1533, %v1756
        %v1758 = vpop.f32.mrb[0].mxu0
        %1759 = vmatprep.mubr.bf16.mxu0 0
        %1760 = vmatmul.mubr.bf16.gmra.mrb[0].mxu0 %v1498
        %v1761 = vpop.f32.mrb[0].mxu0
        %v1762 = vadd.f32 %v1533, %v1761
        %v1763 = vpop.f32.mrb[0].mxu0
        %v1764 = vpop.f32.mrb[0].mxu0
        %v1765 = vadd.f32 %v1533, %v1764
        %v1766 = vpop.f32.mrb[0].mxu0
        %1767 = vmatprep.mubr.bf16.mxu0 0
        %1768 = vmatmul.mubr.bf16.gmra.mrb[0].mxu0 %v1499
        %v1769 = vpop.f32.mrb[0].mxu0
        %v1770 = vadd.f32 %v1533, %v1769
        %v1771 = vpop.f32.mrb[0].mxu0
        %v1772 = vpop.f32.mrb[0].mxu0
        %v1773 = vadd.f32 %v1533, %v1772
        %v1774 = vpop.f32.mrb[0].mxu0
        %1775 = vmatprep.mubr.bf16.mxu0 0
        %1776 = vmatmul.mubr.bf16.gmra.mrb[0].mxu0 %v1500
        %v1777 = vpop.f32.mrb[0].mxu0
        %v1778 = vadd.f32 %v1533, %v1777
        %v1779 = vpop.f32.mrb[0].mxu0
        %v1780 = vpop.f32.mrb[0].mxu0
        %v1781 = vadd.f32 %v1533, %v1780
        %v1782 = vpop.f32.mrb[0].mxu0
        %1783 = vmatprep.mubr.bf16.mxu0 0
        %1784 = vmatmul.mubr.bf16.gmra.mrb[0].mxu0 %v1501
        %v1785 = vpop.f32.mrb[0].mxu0
        %v1786 = vadd.f32 %v1533, %v1785
        %v1787 = vpop.f32.mrb[0].mxu0
        %v1788 = vpop.f32.mrb[0].mxu0
        %v1789 = vadd.f32 %v1533, %v1788
        %v1790 = vpop.f32.mrb[0].mxu0
        %1791 = vmatprep.mubr.bf16.mxu0 0
        %1792 = vmatmul.mubr.bf16.gmra.mrb[0].mxu0 %v1502
        %v1793 = vpop.f32.mrb[0].mxu0
        %v1794 = vadd.f32 %v1533, %v1793
        %v1795 = vpop.f32.mrb[0].mxu0
        %v1796 = vpop.f32.mrb[0].mxu0
        %v1797 = vadd.f32 %v1533, %v1796
        %v1798 = vpop.f32.mrb[0].mxu0
        %1799 = vmatprep.mubr.bf16.mxu0 0
        %1800 = vmatmul.mubr.bf16.gmra.mrb[0].mxu0 %v1503
        %v1801 = vpop.f32.mrb[0].mxu0
        %v1802 = vadd.f32 %v1533, %v1801
        %v1803 = vpop.f32.mrb[0].mxu0
        %v1804 = vpop.f32.mrb[0].mxu0
        %v1805 = vadd.f32 %v1533, %v1804
        %v1806 = vpop.f32.mrb[0].mxu0
        %1807 = vmatprep.mubr.bf16.mxu0 0
        %1808 = vmatmul.mubr.bf16.gmra.mrb[0].mxu0 %v1504
        %v1809 = vpop.f32.mrb[0].mxu0
        %v1810 = vadd.f32 %v1533, %v1809
        %v1811 = vpop.f32.mrb[0].mxu0
        %v1812 = vpop.f32.mrb[0].mxu0
        %v1813 = vadd.f32 %v1533, %v1812
        %v1814 = vpop.f32.mrb[0].mxu0
        %1815 = vmatprep.mubr.bf16.mxu0 0
        %1816 = vmatmul.mubr.bf16.gmra.mrb[0].mxu0 %v1505
        %v1817 = vpop.f32.mrb[0].mxu0
        %v1818 = vadd.f32 %v1533, %v1817
        %v1819 = vpop.f32.mrb[0].mxu0
        %v1820 = vpop.f32.mrb[0].mxu0
        %v1821 = vadd.f32 %v1533, %v1820
        %v1822 = vpop.f32.mrb[0].mxu0
        %1823 = vmatprep.mubr.bf16.mxu0 0
        %1824 = vmatmul.mubr.bf16.gmra.mrb[0].mxu0 %v1506
        %v1825 = vpop.f32.mrb[0].mxu0
        %v1826 = vadd.f32 %v1533, %v1825
        %v1827 = vpop.f32.mrb[0].mxu0
        %v1828 = vpop.f32.mrb[0].mxu0
        %v1829 = vadd.f32 %v1533, %v1828
        %v1830 = vpop.f32.mrb[0].mxu0
        %1831 = vmatprep.mubr.bf16.mxu0 0
        %1832 = vmatmul.mubr.bf16.gmra.mrb[0].mxu0 %v1507
        %v1833 = vpop.f32.mrb[0].mxu0
        %v1834 = vadd.f32 %v1533, %v1833
        %v1835 = vpop.f32.mrb[0].mxu0
        %v1836 = vpop.f32.mrb[0].mxu0
        %v1837 = vadd.f32 %v1533, %v1836
        %v1838 = vpop.f32.mrb[0].mxu0
        %1839 = vmatprep.mubr.bf16.mxu0 0
        %1840 = vmatmul.mubr.bf16.gmra.mrb[0].mxu0 %v1508
        %v1841 = vpop.f32.mrb[0].mxu0
        %v1842 = vadd.f32 %v1533, %v1841
        %v1843 = vpop.f32.mrb[0].mxu0
        %v1844 = vpop.f32.mrb[0].mxu0
        %v1845 = vadd.f32 %v1533, %v1844
        %v1846 = vpop.f32.mrb[0].mxu0
        %1847 = vmatprep.mubr.bf16.mxu0 0
        %1848 = vmatmul.mubr.bf16.gmra.mrb[0].mxu0 %v1509
        %v1849 = vpop.f32.mrb[0].mxu0
        %v1850 = vadd.f32 %v1533, %v1849
        %v1851 = vpop.f32.mrb[0].mxu0
        %v1852 = vpop.f32.mrb[0].mxu0
        %v1853 = vadd.f32 %v1533, %v1852
        %v1854 = vpop.f32.mrb[0].mxu0
        %1855 = vmatprep.mubr.bf16.mxu0 0
        %1856 = vmatmul.mubr.bf16.gmra.mrb[0].mxu0 %v1510
        %v1857 = vpop.f32.mrb[0].mxu0
        %v1858 = vadd.f32 %v1533, %v1857
        %v1859 = vpop.f32.mrb[0].mxu0
        %v1860 = vpop.f32.mrb[0].mxu0
        %v1861 = vadd.f32 %v1533, %v1860
        %v1862 = vpop.f32.mrb[0].mxu0
        %1863 = vmatprep.mubr.bf16.mxu0 0
        %1864 = vmatmul.mubr.bf16.gmra.mrb[0].mxu0 %v1511
        %v1865 = vpop.f32.mrb[0].mxu0
        %v1866 = vadd.f32 %v1533, %v1865
        %v1867 = vpop.f32.mrb[0].mxu0
        %v1868 = vpop.f32.mrb[0].mxu0
        %v1869 = vadd.f32 %v1533, %v1868
        %v1870 = vpop.f32.mrb[0].mxu0
        %1871 = vdwg.mxu0
        %1872 = vst [vmem:[%s340] sm:$0xff] %v1618
        %1873 = vst [vmem:[%s340 + $0x8] sm:$0xff] %v1621
        %1874 = vst [vmem:[%s340 + $0x10] sm:$0xff] %v1626
        %1875 = vst [vmem:[%s340 + $0x18] sm:$0xff] %v1629
        %1876 = vst [vmem:[%s340 + $0x20] sm:$0xff] %v1634
        %1877 = vst [vmem:[%s340 + $0x28] sm:$0xff] %v1637
        %1878 = vst [vmem:[%s340 + $0x30] sm:$0xff] %v1642
        %1879 = vst [vmem:[%s340 + $0x38] sm:$0xff] %v1645
        %1880 = vst [vmem:[%s340 + $0x40] sm:$0xff] %v1650
        %1881 = vst [vmem:[%s340 + $0x48] sm:$0xff] %v1653
        %1882 = vst [vmem:[%s340 + $0x50] sm:$0xff] %v1658
        %1883 = vst [vmem:[%s340 + $0x58] sm:$0xff] %v1661
        %1884 = vst [vmem:[%s340 + $0x60] sm:$0xff] %v1666
        %1885 = vst [vmem:[%s340 + $0x68] sm:$0xff] %v1669
        %1886 = vst [vmem:[%s340 + $0x70] sm:$0xff] %v1674
        %1887 = vst [vmem:[%s340 + $0x78] sm:$0xff] %v1677
        %1888 = vst [vmem:[%s340 + $0x80] sm:$0xff] %v1682
        %1889 = vst [vmem:[%s340 + $0x88] sm:$0xff] %v1685
        %1890 = vst [vmem:[%s340 + $0x90] sm:$0xff] %v1690
        %1891 = vst [vmem:[%s340 + $0x98] sm:$0xff] %v1693
        %1892 = vst [vmem:[%s340 + $0xa0] sm:$0xff] %v1698
        %1893 = vst [vmem:[%s340 + $0xa8] sm:$0xff] %v1701
        %1894 = vst [vmem:[%s340 + $0xb0] sm:$0xff] %v1706
        %1895 = vst [vmem:[%s340 + $0xb8] sm:$0xff] %v1709
        %1896 = vst [vmem:[%s340 + $0xc0] sm:$0xff] %v1714
        %1897 = vst [vmem:[%s340 + $0xc8] sm:$0xff] %v1717
        %1898 = vst [vmem:[%s340 + $0xd0] sm:$0xff] %v1722
        %1899 = vst [vmem:[%s340 + $0xd8] sm:$0xff] %v1725
        %1900 = vst [vmem:[%s340 + $0xe0] sm:$0xff] %v1730
        %1901 = vst [vmem:[%s340 + $0xe8] sm:$0xff] %v1733
        %1902 = vst [vmem:[%s340 + $0xf0] sm:$0xff] %v1738
        %1903 = vst [vmem:[%s340 + $0xf8] sm:$0xff] %v1741
        %1904 = vst [vmem:[%s340 + $0x100] sm:$0xff] %v1746
        %1905 = vst [vmem:[%s340 + $0x108] sm:$0xff] %v1749
        %1906 = vst [vmem:[%s340 + $0x110] sm:$0xff] %v1754
        %1907 = vst [vmem:[%s340 + $0x118] sm:$0xff] %v1757
        %1908 = vst [vmem:[%s340 + $0x120] sm:$0xff] %v1762
        %1909 = vst [vmem:[%s340 + $0x128] sm:$0xff] %v1765
        %1910 = vst [vmem:[%s340 + $0x130] sm:$0xff] %v1770
        %1911 = vst [vmem:[%s340 + $0x138] sm:$0xff] %v1773
        %1912 = vst [vmem:[%s340 + $0x140] sm:$0xff] %v1778
        %1913 = vst [vmem:[%s340 + $0x148] sm:$0xff] %v1781
        %1914 = vst [vmem:[%s340 + $0x150] sm:$0xff] %v1786
        %1915 = vst [vmem:[%s340 + $0x158] sm:$0xff] %v1789
        %1916 = vst [vmem:[%s340 + $0x160] sm:$0xff] %v1794
        %1917 = vst [vmem:[%s340 + $0x168] sm:$0xff] %v1797
        %1918 = vst [vmem:[%s340 + $0x170] sm:$0xff] %v1802
        %1919 = vst [vmem:[%s340 + $0x178] sm:$0xff] %v1805
        %1920 = vst [vmem:[%s340 + $0x180] sm:$0xff] %v1810
        %1921 = vst [vmem:[%s340 + $0x188] sm:$0xff] %v1813
        %1922 = vst [vmem:[%s340 + $0x190] sm:$0xff] %v1818
        %1923 = vst [vmem:[%s340 + $0x198] sm:$0xff] %v1821
        %1924 = vst [vmem:[%s340 + $0x1a0] sm:$0xff] %v1826
        %1925 = vst [vmem:[%s340 + $0x1a8] sm:$0xff] %v1829
        %1926 = vst [vmem:[%s340 + $0x1b0] sm:$0xff] %v1834
        %1927 = vst [vmem:[%s340 + $0x1b8] sm:$0xff] %v1837
        %1928 = vst [vmem:[%s340 + $0x1c0] sm:$0xff] %v1842
        %1929 = vst [vmem:[%s340 + $0x1c8] sm:$0xff] %v1845
        %1930 = vst [vmem:[%s340 + $0x1d0] sm:$0xff] %v1850
        %1931 = vst [vmem:[%s340 + $0x1d8] sm:$0xff] %v1853
        %1932 = vst [vmem:[%s340 + $0x1e0] sm:$0xff] %v1858
        %1933 = vst [vmem:[%s340 + $0x1e8] sm:$0xff] %v1861
        %1934 = vst [vmem:[%s340 + $0x1f0] sm:$0xff] %v1866
        %1935 = vst [vmem:[%s340 + $0x1f8] sm:$0xff] %v1869
        %s1936 = sand.u32 %s186, 1
        %s1937 = scalar_lea.sflag [#allocation4], %s1936
        %s1938 = sand.u32 %s186, 1
        %s1939 = smul.addr %s1938, 512
        %s1940 = scalar_lea.vmem [#allocation10], %s1939
        // Predicated region
        $region65: #{tpu_custom_call.1} parent=47 // pred_check
          %p1941 = pneg %p196
        $region66: #{tpu_custom_call.1} parent=47 // pred_check_branch
          %1943 = sbr.rel (%p1941) target = $region68
        $region67: #{tpu_custom_call.1} parent=47 // pred_region
          %s1944 = smul.u32 64, %s26
          %s1946 = ssub.s32 8192, 8192
          %1947 = vsyncadd %s1937, %s1946
          %s1948 = smul.addr %s1944, 128
          %s1949 = scalar_lea.hbm %s7, %s1948
          %s1950 = sshll.u32 %s1940, 4
          %s1951 = int_to_ptr.vmem [resolvable:$true] %s1950
          %1956 = dma.vmem_to_hbm [thread:$0]  %s1951, 8192, %s1949, %s1937, 128, 128, 8
        $region68: #{tpu_custom_call.1} parent=47 // pred_fallthru
          _
      $region48: #{tpu_custom_call.1} parent=5 // pred_fallthru
        _
      %p1957 = scmp.le.s32.totalorder 2, %s21
      // Predicated region
      $region69: #{tpu_custom_call.1} parent=5 // pred_check
        %p1958 = pneg %p1957
      $region70: #{tpu_custom_call.1} parent=5 // pred_check_branch
        %1960 = sbr.rel (%p1958) target = $region72
      $region71: #{tpu_custom_call.1} parent=5 // pred_region
        %s1961 = ssub.s32 %s21, 2
        // Predicated region
        $region73: #{tpu_custom_call.1} parent=71 // pred_check
          %p1962 = pneg %p202
        $region74: #{tpu_custom_call.1} parent=71 // pred_check_branch
          %1964 = sbr.rel (%p1962) target = $region76
        $region75: #{tpu_custom_call.1} parent=71 // pred_region
          %s1965 = sand.u32 %s187, 1
          %s1966 = scalar_lea.sflag [#allocation4], %s1965
          %s1967 = sand.u32 %s187, 1
          %s1968 = smul.addr %s1967, 512
          %s1969 = scalar_lea.vmem [#allocation10], %s1968
          %1970 = dma.done %s1966, 8192
        $region76: #{tpu_custom_call.1} parent=71 // pred_fallthru
          _
      $region72: #{tpu_custom_call.1} parent=5 // pred_fallthru
        _
    $region6: #{tpu_custom_call.1} parent=1 // loop_footer
      %s25 = sadd.s32 1, %s21
    $region7: #{tpu_custom_call.1} parent=1 // loop_footer_branch
      %20 = sbr.rel target = $region3
    $region8: #{tpu_custom_call.1} parent=1 // loop_exit
      _
    %1971 = vsyncpa [#allocation3], 1
    %s1972 = scalar_lea.sflag [#allocation3], 1
    %1973 = vsyncpa %s1972, 1
    %1974 = vsyncpa [#allocation6], 1
    %1975 = vsyncpa [#allocation9], 1
    %1976 = vsyncpa [#allocation4], 1
    %s1977 = scalar_lea.sflag [#allocation4], 1
    %1978 = vsyncpa %s1977, 1

</llo_original>
